<compile_context>
chip_gen: v5e
topology: v5e:2x2
jax: 0.10.0
libtpu: 0.0.40
codegen_flags: <defaults>
</compile_context>

<pallas_src>
import functools

import jax
import jax.numpy as jnp
import numpy as np
from jax.experimental import pallas as pl
from jax.experimental.pallas import tpu as pltpu


def _resblock_kernel(xp_ref, w0_ref, b0_ref, w1_ref, b1_ref, o_ref, ypad_ref,
                     *, D, H, W, C):
    """Fused ResBlock for one batch element.

    xp_ref    : (1, D+2, H+2, W*C) f32   D/H zero-padded input, W folded into lanes
    w0/w1_ref : (9*W*C, W*C)      bf16   width-folded banded conv weights
    b0/b1_ref : (1, W*C)          f32    biases tiled along W
    o_ref     : (1, D*H, W*C)     f32    lane-dense output block
    ypad_ref  : VMEM (D+2, H+2, W*C) bf16  D/H zero-padded conv0 output (scratch)
    """
    Dp, Hp = D + 2, H + 2
    WC = W * C
    DH = D * H
    bf16 = jnp.bfloat16

    # relu on the D/H-padded block (relu(0) == 0 keeps the halo a valid zero pad;
    # W-boundary zeros are handled inside the banded weight matrix).
    rx = jnp.maximum(xp_ref[0], 0.0)          # (Dp, Hp, WC) f32
    rxb = rx.astype(bf16)

    def conv3d_banded(apad_b, wb_ref):
        # Single MXU matmul per conv: (DH, 9*WC) x (9*WC, WC) -> (DH, WC), f32 acc.
        # The 9 (kd, kh) taps are slices along D (free) and H (sublane shift) only;
        # each slab is exactly one 128-lane tile when WC == 128, so the concat is
        # pure placement.
        slabs = []
        for kd in range(3):
            for kh in range(3):
                slabs.append(apad_b[kd:kd + D, kh:kh + H, :].reshape(DH, WC))
        patches = jnp.concatenate(slabs, axis=-1)            # (DH, 9*WC) bf16
        return jnp.dot(patches, wb_ref[...],
                       preferred_element_type=jnp.float32)   # (DH, WC) f32

    # ---- conv0(relu(x)) ----
    y0 = conv3d_banded(rxb, w0_ref) + b0_ref[...]            # (DH, WC) f32

    # Stage conv0 output into the D/H zero-padded scratch for conv1.  Only the halo
    # faces are zeroed (interior fully overwritten right after); done every grid
    # step so it stays correct when the "parallel" batch axis is sharded across
    # TensorCores (each core has its own scratch).
    ypad_ref[0:1, :, :] = jnp.zeros((1, Hp, WC), bf16)
    ypad_ref[Dp - 1:Dp, :, :] = jnp.zeros((1, Hp, WC), bf16)
    ypad_ref[:, 0:1, :] = jnp.zeros((Dp, 1, WC), bf16)
    ypad_ref[:, Hp - 1:Hp, :] = jnp.zeros((Dp, 1, WC), bf16)
    ypad_ref[1:1 + D, 1:1 + H, :] = y0.reshape(D, H, WC).astype(bf16)

    # ---- conv1(conv0_out) ----
    y1 = conv3d_banded(ypad_ref[...], w1_ref) + b1_ref[...]  # (DH, WC) f32

    # ---- residual: conv1_out + relu(x)  (elementwise kept in f32) ----
    res = rx[1:1 + D, 1:1 + H, :].reshape(DH, WC)
    o_ref[...] = (y1 + res).reshape(1, DH, WC).astype(o_ref.dtype)


def _banded_weight(w, W, C):
    """(Cout, Cin, 3, 3, 3) -> (9*W*Cin, W*Cout) width-folded banded matrix, bf16.

    Wb[((kd*3+kh)*W + w_in)*C + ci, w_out*C + co] = w[co, ci, kd, kh, kw]
      where kw = w_in - w_out + 1 in {0,1,2}, zero otherwise (implicit W zero-pad).
    """
    wt = jnp.transpose(w, (2, 3, 4, 1, 0))                     # (kd, kh, kw, ci, co)
    shift = np.stack([np.eye(W, k=1 - kw, dtype=np.float32) for kw in range(3)])
    wb = jnp.einsum('kab,dhkio->dhaibo', shift, wt)            # (3,3,W,C,W,C)
    return wb.reshape(9 * W * C, W * C).astype(jnp.bfloat16)


def resblock_forward(x_ncdhw, w0, b0, w1, b1):
    """x_ncdhw: (N, C, D, H, W) f32; w*: (C, C, 3, 3, 3); b*: (C,). Returns NCDHW f32."""
    N, C, D, H, W = x_ncdhw.shape
    assert w0.shape == (C, C, 3, 3, 3) and w1.shape == (C, C, 3, 3, 3)
    Dp, Hp = D + 2, H + 2
    WC = W * C
    DH = D * H

    # Glue (plain JAX): layout change, fold W into lanes, D/H zero-pad, weight repack.
    x = jnp.transpose(x_ncdhw, (0, 2, 3, 4, 1)).astype(jnp.float32)   # NDHWC
    x = x.reshape(N, D, H, WC)
    xp = jnp.pad(x, ((0, 0), (1, 1), (1, 1), (0, 0)))                 # (N, Dp, Hp, WC)

    w0b, w1b = _banded_weight(w0, W, C), _banded_weight(w1, W, C)
    b0r = jnp.tile(b0.astype(jnp.float32), W).reshape(1, WC)
    b1r = jnp.tile(b1.astype(jnp.float32), W).reshape(1, WC)

    kernel = functools.partial(_resblock_kernel, D=D, H=H, W=W, C=C)

    out = pl.pallas_call(
        kernel,
        out_shape=jax.ShapeDtypeStruct((N, DH, WC), jnp.float32),
        grid=(N,),
        in_specs=[
            pl.BlockSpec((1, Dp, Hp, WC), lambda n: (n, 0, 0, 0)),
            pl.BlockSpec((9 * WC, WC), lambda n: (0, 0)),
            pl.BlockSpec((1, WC), lambda n: (0, 0)),
            pl.BlockSpec((9 * WC, WC), lambda n: (0, 0)),
            pl.BlockSpec((1, WC), lambda n: (0, 0)),
        ],
        out_specs=pl.BlockSpec((1, DH, WC), lambda n: (n, 0, 0)),
        scratch_shapes=[pltpu.VMEM((Dp, Hp, WC), jnp.bfloat16)],
        compiler_params=pltpu.CompilerParams(
            dimension_semantics=("parallel",),          # shard batch across TCs (v7x)
            vmem_limit_bytes=64 * 1024 * 1024,          # explicit; <= v7x physical VMEM
        ),
    )(xp, w0b, b0r, w1b, b1r)

    out = out.reshape(N, D, H, W, C)
    return jnp.transpose(out, (0, 4, 1, 2, 3))                        # NCDHW


def resblock_ref(x, w0, b0, w1, b1):
    """Pure-JAX f32 reference mirroring the PyTorch forward (NCDHW)."""
    dn = jax.lax.conv_dimension_numbers(x.shape, w0.shape,
                                        ("NCDHW", "OIDHW", "NCDHW"))

    def conv(inp, w, b):
        y = jax.lax.conv_general_dilated(
            inp, w, window_strides=(1, 1, 1),
            padding=((1, 1), (1, 1), (1, 1)),
            dimension_numbers=dn,
            precision=jax.lax.Precision.HIGHEST)
        return y + b.reshape(1, -1, 1, 1, 1)

    rx = jnp.maximum(x, 0.0)
    c0 = conv(rx, w0, b0)
    c1 = conv(c0, w1, b1)
    return c1 + rx


if __name__ == "__main__":
    # Small shapes consistent with ResBlock(in_channels == mid_channels == C).
    N, C, D, H, W = 2, 16, 8, 8, 8
    key = jax.random.PRNGKey(0)
    k1, k2, k3, k4, k5 = jax.random.split(key, 5)

    x = jax.random.normal(k1, (N, C, D, H, W), jnp.float32)
    w0 = 0.05 * jax.random.normal(k2, (C, C, 3, 3, 3), jnp.float32)
    b0 = 0.05 * jax.random.normal(k3, (C,), jnp.float32)
    w1 = 0.05 * jax.random.normal(k4, (C, C, 3, 3, 3), jnp.float32)
    b1 = 0.05 * jax.random.normal(k5, (C,), jnp.float32)

    out = jax.block_until_ready(resblock_forward(x, w0, b0, w1, b1))
    ref = jax.block_until_ready(resblock_ref(x, w0, b0, w1, b1))
    # Kernel uses bf16 MXU operands with f32 accumulation, so tolerance vs the
    # f32-HIGHEST reference is relaxed accordingly.
    np.testing.assert_allclose(np.asarray(out), np.asarray(ref),
                               atol=5e-2, rtol=5e-2)
    print("KERNEL_OK")
</pallas_src>

<mosaic_0001>
module attributes {stable_mosaic.version = 11 : i64} {
  func.func @_resblock_kernel(%arg0: i32, %arg1: memref<1x10x10x128xf32, #tpu.memory_space<vmem>>, %arg2: memref<1152x128xbf16, #tpu.memory_space<vmem>>, %arg3: memref<1x128xf32, #tpu.memory_space<vmem>>, %arg4: memref<1152x128xbf16, #tpu.memory_space<vmem>>, %arg5: memref<1x128xf32, #tpu.memory_space<vmem>>, %arg6: memref<1x64x128xf32, #tpu.memory_space<vmem>>, %arg7: memref<10x10x128xbf16, #tpu.memory_space<vmem>>) attributes {dimension_semantics = [#tpu.dimension_semantics<parallel>], iteration_bounds = array<i64: 2>, scalar_prefetch = 0 : i64, scratch_operands = 1 : i64, tpu.core_type = #tpu.core_type<tc>, window_params = [{transform_indices = @transform_0, window_bounds = array<i64: 1, 10, 10, 128>}, {pipeline_mode = #tpu.pipeline_mode<synchronous>, transform_indices = @transform_1, window_bounds = array<i64: 1152, 128>}, {pipeline_mode = #tpu.pipeline_mode<synchronous>, transform_indices = @transform_2, window_bounds = array<i64: 1, 128>}, {pipeline_mode = #tpu.pipeline_mode<synchronous>, transform_indices = @transform_3, window_bounds = array<i64: 1152, 128>}, {pipeline_mode = #tpu.pipeline_mode<synchronous>, transform_indices = @transform_4, window_bounds = array<i64: 1, 128>}, {transform_indices = @transform_5, window_bounds = array<i64: 1, 64, 128>}]} {
    %c0 = arith.constant 0 : index
    %c0_0 = arith.constant 0 : index
    %c0_1 = arith.constant 0 : index
    %c0_2 = arith.constant 0 : index
    %0 = vector.load %arg1[%c0, %c0_0, %c0_1, %c0_2] : memref<1x10x10x128xf32, #tpu.memory_space<vmem>>, vector<1x10x10x128xf32>
    %1 = vector.shape_cast %0 : vector<1x10x10x128xf32> to vector<10x10x128xf32>
    %cst = arith.constant 0.000000e+00 : f32
    %2 = vector.broadcast %cst : f32 to vector<10x10x128xf32>
    %3 = arith.maximumf %1, %2 : vector<10x10x128xf32>
    %4 = arith.truncf %3 : vector<10x10x128xf32> to vector<10x10x128xbf16>
    %5 = vector.extract_strided_slice %4 {offsets = [0, 0, 0], sizes = [8, 8, 128], strides = [1, 1, 1]} : vector<10x10x128xbf16> to vector<8x8x128xbf16>
    %6 = vector.shape_cast %5 : vector<8x8x128xbf16> to vector<64x128xbf16>
    %7 = vector.extract_strided_slice %4 {offsets = [0, 1, 0], sizes = [8, 8, 128], strides = [1, 1, 1]} : vector<10x10x128xbf16> to vector<8x8x128xbf16>
    %8 = vector.shape_cast %7 : vector<8x8x128xbf16> to vector<64x128xbf16>
    %9 = vector.extract_strided_slice %4 {offsets = [0, 2, 0], sizes = [8, 8, 128], strides = [1, 1, 1]} : vector<10x10x128xbf16> to vector<8x8x128xbf16>
    %10 = vector.shape_cast %9 : vector<8x8x128xbf16> to vector<64x128xbf16>
    %11 = vector.extract_strided_slice %4 {offsets = [1, 0, 0], sizes = [8, 8, 128], strides = [1, 1, 1]} : vector<10x10x128xbf16> to vector<8x8x128xbf16>
    %12 = vector.shape_cast %11 : vector<8x8x128xbf16> to vector<64x128xbf16>
    %13 = vector.extract_strided_slice %4 {offsets = [1, 1, 0], sizes = [8, 8, 128], strides = [1, 1, 1]} : vector<10x10x128xbf16> to vector<8x8x128xbf16>
    %14 = vector.shape_cast %13 : vector<8x8x128xbf16> to vector<64x128xbf16>
    %15 = vector.extract_strided_slice %4 {offsets = [1, 2, 0], sizes = [8, 8, 128], strides = [1, 1, 1]} : vector<10x10x128xbf16> to vector<8x8x128xbf16>
    %16 = vector.shape_cast %15 : vector<8x8x128xbf16> to vector<64x128xbf16>
    %17 = vector.extract_strided_slice %4 {offsets = [2, 0, 0], sizes = [8, 8, 128], strides = [1, 1, 1]} : vector<10x10x128xbf16> to vector<8x8x128xbf16>
    %18 = vector.shape_cast %17 : vector<8x8x128xbf16> to vector<64x128xbf16>
    %19 = vector.extract_strided_slice %4 {offsets = [2, 1, 0], sizes = [8, 8, 128], strides = [1, 1, 1]} : vector<10x10x128xbf16> to vector<8x8x128xbf16>
    %20 = vector.shape_cast %19 : vector<8x8x128xbf16> to vector<64x128xbf16>
    %21 = vector.extract_strided_slice %4 {offsets = [2, 2, 0], sizes = [8, 8, 128], strides = [1, 1, 1]} : vector<10x10x128xbf16> to vector<8x8x128xbf16>
    %22 = vector.shape_cast %21 : vector<8x8x128xbf16> to vector<64x128xbf16>
    %23 = tpu.concatenate %6, %8, %10, %12, %14, %16, %18, %20, %22 in 1 : vector<64x128xbf16>, vector<64x128xbf16>, vector<64x128xbf16>, vector<64x128xbf16>, vector<64x128xbf16>, vector<64x128xbf16>, vector<64x128xbf16>, vector<64x128xbf16>, vector<64x128xbf16> -> vector<64x1152xbf16>
    %c0_3 = arith.constant 0 : index
    %c0_4 = arith.constant 0 : index
    %24 = vector.load %arg2[%c0_3, %c0_4] : memref<1152x128xbf16, #tpu.memory_space<vmem>>, vector<1152x128xbf16>
    %cst_5 = arith.constant dense<0.000000e+00> : vector<64x128xf32>
    %25 = tpu.matmul %23, %24, %cst_5 {dimension_numbers = #tpu.dot_dimension_numbers<[1], [0], [0], [1], [0, 0, 1, 1], [], []>} : vector<64x1152xbf16>, vector<1152x128xbf16>, vector<64x128xf32> -> vector<64x128xf32>
    %c0_6 = arith.constant 0 : index
    %c0_7 = arith.constant 0 : index
    %26 = vector.load %arg3[%c0_6, %c0_7] : memref<1x128xf32, #tpu.memory_space<vmem>>, vector<1x128xf32>
    %27 = vector.broadcast %26 : vector<1x128xf32> to vector<64x128xf32>
    %28 = arith.addf %25, %27 : vector<64x128xf32>
    %cst_8 = arith.constant 0.000000e+00 : bf16
    %29 = vector.broadcast %cst_8 : bf16 to vector<1x10x128xbf16>
    %c0_9 = arith.constant 0 : index
    %c0_10 = arith.constant 0 : index
    %c0_11 = arith.constant 0 : index
    %30 = vector.load %arg7[%c0_9, %c0_10, %c0_11] : memref<10x10x128xbf16, #tpu.memory_space<vmem>>, vector<1x10x128xbf16>
    tpu.vector_store %arg7[%c0_9, %c0_10, %c0_11], %29 {strides = array<i32>} : memref<10x10x128xbf16, #tpu.memory_space<vmem>>, vector<1x10x128xbf16>,
    %cst_12 = arith.constant 0.000000e+00 : bf16
    %31 = vector.broadcast %cst_12 : bf16 to vector<1x10x128xbf16>
    %c9 = arith.constant 9 : index
    %c0_13 = arith.constant 0 : index
    %c0_14 = arith.constant 0 : index
    %32 = vector.load %arg7[%c9, %c0_13, %c0_14] : memref<10x10x128xbf16, #tpu.memory_space<vmem>>, vector<1x10x128xbf16>
    tpu.vector_store %arg7[%c9, %c0_13, %c0_14], %31 {strides = array<i32>} : memref<10x10x128xbf16, #tpu.memory_space<vmem>>, vector<1x10x128xbf16>,
    %cst_15 = arith.constant 0.000000e+00 : bf16
    %33 = vector.broadcast %cst_15 : bf16 to vector<10x1x128xbf16>
    %c0_16 = arith.constant 0 : index
    %c0_17 = arith.constant 0 : index
    %c0_18 = arith.constant 0 : index
    %34 = vector.load %arg7[%c0_16, %c0_17, %c0_18] : memref<10x10x128xbf16, #tpu.memory_space<vmem>>, vector<10x1x128xbf16>
    tpu.vector_store %arg7[%c0_16, %c0_17, %c0_18], %33 {strides = array<i32>} : memref<10x10x128xbf16, #tpu.memory_space<vmem>>, vector<10x1x128xbf16>,
    %cst_19 = arith.constant 0.000000e+00 : bf16
    %35 = vector.broadcast %cst_19 : bf16 to vector<10x1x128xbf16>
    %c0_20 = arith.constant 0 : index
    %c9_21 = arith.constant 9 : index
    %c0_22 = arith.constant 0 : index
    %36 = vector.load %arg7[%c0_20, %c9_21, %c0_22] : memref<10x10x128xbf16, #tpu.memory_space<vmem>>, vector<10x1x128xbf16>
    tpu.vector_store %arg7[%c0_20, %c9_21, %c0_22], %35 {strides = array<i32>} : memref<10x10x128xbf16, #tpu.memory_space<vmem>>, vector<10x1x128xbf16>,
    %37 = vector.shape_cast %28 : vector<64x128xf32> to vector<8x8x128xf32>
    %38 = arith.truncf %37 : vector<8x8x128xf32> to vector<8x8x128xbf16>
    %c1 = arith.constant 1 : index
    %c1_23 = arith.constant 1 : index
    %c0_24 = arith.constant 0 : index
    %39 = vector.load %arg7[%c1, %c1_23, %c0_24] : memref<10x10x128xbf16, #tpu.memory_space<vmem>>, vector<8x8x128xbf16>
    tpu.vector_store %arg7[%c1, %c1_23, %c0_24], %38 {strides = array<i32>} : memref<10x10x128xbf16, #tpu.memory_space<vmem>>, vector<8x8x128xbf16>,
    %c0_25 = arith.constant 0 : index
    %c0_26 = arith.constant 0 : index
    %c0_27 = arith.constant 0 : index
    %40 = vector.load %arg7[%c0_25, %c0_26, %c0_27] : memref<10x10x128xbf16, #tpu.memory_space<vmem>>, vector<10x10x128xbf16>
    %41 = vector.extract_strided_slice %40 {offsets = [0, 0, 0], sizes = [8, 8, 128], strides = [1, 1, 1]} : vector<10x10x128xbf16> to vector<8x8x128xbf16>
    %42 = vector.shape_cast %41 : vector<8x8x128xbf16> to vector<64x128xbf16>
    %43 = vector.extract_strided_slice %40 {offsets = [0, 1, 0], sizes = [8, 8, 128], strides = [1, 1, 1]} : vector<10x10x128xbf16> to vector<8x8x128xbf16>
    %44 = vector.shape_cast %43 : vector<8x8x128xbf16> to vector<64x128xbf16>
    %45 = vector.extract_strided_slice %40 {offsets = [0, 2, 0], sizes = [8, 8, 128], strides = [1, 1, 1]} : vector<10x10x128xbf16> to vector<8x8x128xbf16>
    %46 = vector.shape_cast %45 : vector<8x8x128xbf16> to vector<64x128xbf16>
    %47 = vector.extract_strided_slice %40 {offsets = [1, 0, 0], sizes = [8, 8, 128], strides = [1, 1, 1]} : vector<10x10x128xbf16> to vector<8x8x128xbf16>
    %48 = vector.shape_cast %47 : vector<8x8x128xbf16> to vector<64x128xbf16>
    %49 = vector.extract_strided_slice %40 {offsets = [1, 1, 0], sizes = [8, 8, 128], strides = [1, 1, 1]} : vector<10x10x128xbf16> to vector<8x8x128xbf16>
    %50 = vector.shape_cast %49 : vector<8x8x128xbf16> to vector<64x128xbf16>
    %51 = vector.extract_strided_slice %40 {offsets = [1, 2, 0], sizes = [8, 8, 128], strides = [1, 1, 1]} : vector<10x10x128xbf16> to vector<8x8x128xbf16>
    %52 = vector.shape_cast %51 : vector<8x8x128xbf16> to vector<64x128xbf16>
    %53 = vector.extract_strided_slice %40 {offsets = [2, 0, 0], sizes = [8, 8, 128], strides = [1, 1, 1]} : vector<10x10x128xbf16> to vector<8x8x128xbf16>
    %54 = vector.shape_cast %53 : vector<8x8x128xbf16> to vector<64x128xbf16>
    %55 = vector.extract_strided_slice %40 {offsets = [2, 1, 0], sizes = [8, 8, 128], strides = [1, 1, 1]} : vector<10x10x128xbf16> to vector<8x8x128xbf16>
    %56 = vector.shape_cast %55 : vector<8x8x128xbf16> to vector<64x128xbf16>
    %57 = vector.extract_strided_slice %40 {offsets = [2, 2, 0], sizes = [8, 8, 128], strides = [1, 1, 1]} : vector<10x10x128xbf16> to vector<8x8x128xbf16>
    %58 = vector.shape_cast %57 : vector<8x8x128xbf16> to vector<64x128xbf16>
    %59 = tpu.concatenate %42, %44, %46, %48, %50, %52, %54, %56, %58 in 1 : vector<64x128xbf16>, vector<64x128xbf16>, vector<64x128xbf16>, vector<64x128xbf16>, vector<64x128xbf16>, vector<64x128xbf16>, vector<64x128xbf16>, vector<64x128xbf16>, vector<64x128xbf16> -> vector<64x1152xbf16>
    %c0_28 = arith.constant 0 : index
    %c0_29 = arith.constant 0 : index
    %60 = vector.load %arg4[%c0_28, %c0_29] : memref<1152x128xbf16, #tpu.memory_space<vmem>>, vector<1152x128xbf16>
    %cst_30 = arith.constant dense<0.000000e+00> : vector<64x128xf32>
    %61 = tpu.matmul %59, %60, %cst_30 {dimension_numbers = #tpu.dot_dimension_numbers<[1], [0], [0], [1], [0, 0, 1, 1], [], []>} : vector<64x1152xbf16>, vector<1152x128xbf16>, vector<64x128xf32> -> vector<64x128xf32>
    %c0_31 = arith.constant 0 : index
    %c0_32 = arith.constant 0 : index
    %62 = vector.load %arg5[%c0_31, %c0_32] : memref<1x128xf32, #tpu.memory_space<vmem>>, vector<1x128xf32>
    %63 = vector.broadcast %62 : vector<1x128xf32> to vector<64x128xf32>
    %64 = arith.addf %61, %63 : vector<64x128xf32>
    %65 = vector.extract_strided_slice %3 {offsets = [1, 1, 0], sizes = [8, 8, 128], strides = [1, 1, 1]} : vector<10x10x128xf32> to vector<8x8x128xf32>
    %66 = vector.shape_cast %65 : vector<8x8x128xf32> to vector<64x128xf32>
    %67 = arith.addf %64, %66 : vector<64x128xf32>
    %68 = vector.shape_cast %67 : vector<64x128xf32> to vector<1x64x128xf32>
    %c0_33 = arith.constant 0 : index
    %c0_34 = arith.constant 0 : index
    %c0_35 = arith.constant 0 : index
    %69 = vector.load %arg6[%c0_33, %c0_34, %c0_35] : memref<1x64x128xf32, #tpu.memory_space<vmem>>, vector<1x64x128xf32>
    tpu.vector_store %arg6[%c0_33, %c0_34, %c0_35], %68 {strides = array<i32>} : memref<1x64x128xf32, #tpu.memory_space<vmem>>, vector<1x64x128xf32>,
    return
  }
  func.func @transform_0(%arg0: i32) -> (i32, i32, i32, i32) {
    %c0_i32 = arith.constant 0 : i32
    %c0_i32_0 = arith.constant 0 : i32
    %c0_i32_1 = arith.constant 0 : i32
    %c0_i32_2 = arith.constant 0 : i32
    return %arg0, %c0_i32, %c0_i32_0, %c0_i32_1 : i32, i32, i32, i32
  }
  func.func @transform_1(%arg0: i32) -> (i32, i32) {
    %c0_i32 = arith.constant 0 : i32
    %c0_i32_0 = arith.constant 0 : i32
    %c0_i32_1 = arith.constant 0 : i32
    return %c0_i32, %c0_i32_0 : i32, i32
  }
  func.func @transform_2(%arg0: i32) -> (i32, i32) {
    %c0_i32 = arith.constant 0 : i32
    %c0_i32_0 = arith.constant 0 : i32
    %c0_i32_1 = arith.constant 0 : i32
    return %c0_i32, %c0_i32_0 : i32, i32
  }
  func.func @transform_3(%arg0: i32) -> (i32, i32) {
    %c0_i32 = arith.constant 0 : i32
    %c0_i32_0 = arith.constant 0 : i32
    %c0_i32_1 = arith.constant 0 : i32
    return %c0_i32, %c0_i32_0 : i32, i32
  }
  func.func @transform_4(%arg0: i32) -> (i32, i32) {
    %c0_i32 = arith.constant 0 : i32
    %c0_i32_0 = arith.constant 0 : i32
    %c0_i32_1 = arith.constant 0 : i32
    return %c0_i32, %c0_i32_0 : i32, i32
  }
  func.func @transform_5(%arg0: i32) -> (i32, i32, i32) {
    %c0_i32 = arith.constant 0 : i32
    %c0_i32_0 = arith.constant 0 : i32
    %c0_i32_1 = arith.constant 0 : i32
    return %arg0, %c0_i32, %c0_i32_0 : i32, i32, i32
  }
}

</mosaic_0001>

<llo_original>
// kernel: tpu_custom_call.1
$region0: #{tpu_custom_call.1}
  #allocation0 [shape = 'u32[]', space=smem, size = 0x4, offset = 0x4, fixed_abs, tag = 'smem constant byte address 0x4 - core index']
  #allocation1 [shape = 'u32[72,128]{1,0:T(1,128)}', space=vmem, size = 0x9000, scoped, tag = 'internal scratch']
  #allocation2 [shape = 'bf16[10,10,128]{2,1,0:T(8,128)(2,1)}', space=vmem, size = 0xa000, scoped, tag = 'scratch operand']
  %s0 = inlined_call_operand.vmem [shape: f32[2,10,10,128], index: 0, kind: input, shape index: {}]
  %s1 = inlined_call_operand.hbm [shape: bf16[1152,128], index: 1, kind: input, shape index: {}]
  %s2 = inlined_call_operand.vmem [shape: f32[1,128], index: 2, kind: input, shape index: {}]
  %s3 = inlined_call_operand.hbm [shape: bf16[1152,128], index: 3, kind: input, shape index: {}]
  %s4 = inlined_call_operand.vmem [shape: f32[1,128], index: 4, kind: input, shape index: {}]
  %s5 = inlined_call_operand.hbm [shape: f32[2,64,128], index: 5, kind: output, shape index: {}]
  %s6 = sld [smem:[#allocation0]]
  $region61: #{tpu_custom_call.1} parent=0
    _
  %s8 = ssub.s32 1, %s6
  %s9 = scalar_select 0, %s8, %s6
  $region1: #{tpu_custom_call.1} parent=0
    #allocation3 [shape = 'u8[294912]{0}', space=vmem, size = 0x48000, scoped, tag = 'input window, operand 1, single buffered']
    #allocation4 [shape = 's32[2]{0}', space=sflag, size = 0x8, scoped, tag = 'scoped memory for tpu_custom_call.1']
    #allocation5 [shape = 's32[2]{0}', space=sflag, size = 0x8, scoped, tag = 'scoped memory for tpu_custom_call.1']
    #allocation6 [shape = 'u8[294912]{0}', space=vmem, size = 0x48000, scoped, tag = 'input window, operand 3, single buffered']
    #allocation7 [shape = 's32[1]{0}', space=sflag, size = 0x4, scoped, tag = 'scoped memory for tpu_custom_call.1']
    #allocation8 [shape = 'u8[65536]{0}', space=vmem, size = 0x10000, scoped, tag = 'output window, operand 0']
    %10 = vsyncpa [#allocation4], 0
    %11 = vsyncpa [#allocation7], 0
    %12 = vsyncpa [#allocation5], 0
    %s13 = scalar_lea.sflag [#allocation5], 1
    %14 = vsyncpa %s13, 0
    loop: start=0, step=1, limit=4
    $region2: #{tpu_custom_call.1} parent=1 // loop_pre_header
      _
    $region3: #{tpu_custom_call.1} parent=1 // loop_header
      %s16 = sphi 0, %s20
      %p17 = scmp.ge.s32.totalorder %s16, 4
      %s26 = sphi 0, %s28
      %s29 = sphi 0, %s26
      %s30 = sphi 0, %s29
      %s46 = sphi 0, %s30
      %s50 = sphi 0, %s50
      %s52 = sphi 0, %s50
      %s53 = sphi 0, %s52
      %s67 = sphi 0, %s53
      %s71 = sphi 0, %s71
      %s73 = sphi 0, %s71
      %s74 = sphi 0, %s73
      %s88 = sphi 0, %s74
      %s92 = sphi 0, %s92
      %s94 = sphi 0, %s92
      %s95 = sphi 0, %s94
      %s109 = sphi 0, %s95
      %s113 = sphi 0, %s113
      %s115 = sphi 0, %s113
      %s116 = sphi 0, %s115
      %s130 = sphi 0, %s116
      %s136 = sphi 0, %s138
      %s139 = sphi 0, %s136
      %s140 = sphi 0, %s139
      %s156 = sphi 0, %s140
    $region4: #{tpu_custom_call.1} parent=1 // loop_header_branch
      %19 = sbr.rel (%p17) target = $region8
    $region5: #{tpu_custom_call.1} parent=1 // loop_body
      %s21 = ssub.s32 %s16, 1
      %s22 = ssub.s32 %s16, 2
      %s23 = sadd.s32 %s16, 1
      %s24 = ssub.s32 %s16, %s23
      %p25 = scmp.eq.s32.totalorder %s24, 0
      %s27 = sadd.s32 %s26, 1
      %s28 = scalar_select %p25, %s26, %s27
      %p31 = pneg %p25
      %p32 = scmp.eq.s32.totalorder %s16, 1
      %p33 = por %p31, %p32
      %p34 = scmp.ne.s32.totalorder %s26, %s29
      %p35 = scmp.eq.s32.totalorder %s16, 0
      %p36 = por %p34, %p35
      %p37 = scmp.ne.s32.totalorder %s26, %s29
      %p38 = scmp.eq.s32.totalorder %s21, 1
      %p39 = por %p37, %p38
      %p40 = scmp.ne.s32.totalorder %s29, %s30
      %p41 = scmp.eq.s32.totalorder %s21, 0
      %p42 = por %p40, %p41
      %p43 = scmp.ne.s32.totalorder %s29, %s30
      %p44 = scmp.eq.s32.totalorder %s22, 1
      %p45 = por %p43, %p44
      %p47 = scmp.ne.s32.totalorder %s30, %s46
      %p48 = scmp.eq.s32.totalorder %s22, 0
      %p49 = por %p47, %p48
      %s51 = sadd.s32 %s50, 1
      %p54 = scmp.eq.s32.totalorder %s16, 1
      %p55 = scmp.ne.s32.totalorder %s50, %s52
      %p56 = scmp.eq.s32.totalorder %s16, 0
      %p57 = por %p55, %p56
      %p58 = scmp.ne.s32.totalorder %s50, %s52
      %p59 = scmp.eq.s32.totalorder %s21, 1
      %p60 = por %p58, %p59
      %p61 = scmp.ne.s32.totalorder %s52, %s53
      %p62 = scmp.eq.s32.totalorder %s21, 0
      %p63 = por %p61, %p62
      %p64 = scmp.ne.s32.totalorder %s52, %s53
      %p65 = scmp.eq.s32.totalorder %s22, 1
      %p66 = por %p64, %p65
      %p68 = scmp.ne.s32.totalorder %s53, %s67
      %p69 = scmp.eq.s32.totalorder %s22, 0
      %p70 = por %p68, %p69
      %s72 = sadd.s32 %s71, 1
      %p75 = scmp.eq.s32.totalorder %s16, 1
      %p76 = scmp.ne.s32.totalorder %s71, %s73
      %p77 = scmp.eq.s32.totalorder %s16, 0
      %p78 = por %p76, %p77
      %p79 = scmp.ne.s32.totalorder %s71, %s73
      %p80 = scmp.eq.s32.totalorder %s21, 1
      %p81 = por %p79, %p80
      %p82 = scmp.ne.s32.totalorder %s73, %s74
      %p83 = scmp.eq.s32.totalorder %s21, 0
      %p84 = por %p82, %p83
      %p85 = scmp.ne.s32.totalorder %s73, %s74
      %p86 = scmp.eq.s32.totalorder %s22, 1
      %p87 = por %p85, %p86
      %p89 = scmp.ne.s32.totalorder %s74, %s88
      %p90 = scmp.eq.s32.totalorder %s22, 0
      %p91 = por %p89, %p90
      %s93 = sadd.s32 %s92, 1
      %p96 = scmp.eq.s32.totalorder %s16, 1
      %p97 = scmp.ne.s32.totalorder %s92, %s94
      %p98 = scmp.eq.s32.totalorder %s16, 0
      %p99 = por %p97, %p98
      %p100 = scmp.ne.s32.totalorder %s92, %s94
      %p101 = scmp.eq.s32.totalorder %s21, 1
      %p102 = por %p100, %p101
      %p103 = scmp.ne.s32.totalorder %s94, %s95
      %p104 = scmp.eq.s32.totalorder %s21, 0
      %p105 = por %p103, %p104
      %p106 = scmp.ne.s32.totalorder %s94, %s95
      %p107 = scmp.eq.s32.totalorder %s22, 1
      %p108 = por %p106, %p107
      %p110 = scmp.ne.s32.totalorder %s95, %s109
      %p111 = scmp.eq.s32.totalorder %s22, 0
      %p112 = por %p110, %p111
      %s114 = sadd.s32 %s113, 1
      %p117 = scmp.eq.s32.totalorder %s16, 1
      %p118 = scmp.ne.s32.totalorder %s113, %s115
      %p119 = scmp.eq.s32.totalorder %s16, 0
      %p120 = por %p118, %p119
      %p121 = scmp.ne.s32.totalorder %s113, %s115
      %p122 = scmp.eq.s32.totalorder %s21, 1
      %p123 = por %p121, %p122
      %p124 = scmp.ne.s32.totalorder %s115, %s116
      %p125 = scmp.eq.s32.totalorder %s21, 0
      %p126 = por %p124, %p125
      %p127 = scmp.ne.s32.totalorder %s115, %s116
      %p128 = scmp.eq.s32.totalorder %s22, 1
      %p129 = por %p127, %p128
      %p131 = scmp.ne.s32.totalorder %s116, %s130
      %p132 = scmp.eq.s32.totalorder %s22, 0
      %p133 = por %p131, %p132
      %s134 = ssub.s32 %s16, %s23
      %p135 = scmp.eq.s32.totalorder %s134, 0
      %s137 = sadd.s32 %s136, 1
      %s138 = scalar_select %p135, %s136, %s137
      %p141 = pneg %p135
      %p142 = scmp.eq.s32.totalorder %s16, 1
      %p143 = por %p141, %p142
      %p144 = scmp.ne.s32.totalorder %s136, %s139
      %p145 = scmp.eq.s32.totalorder %s16, 0
      %p146 = por %p144, %p145
      %p147 = scmp.ne.s32.totalorder %s136, %s139
      %p148 = scmp.eq.s32.totalorder %s21, 1
      %p149 = por %p147, %p148
      %p150 = scmp.ne.s32.totalorder %s139, %s140
      %p151 = scmp.eq.s32.totalorder %s21, 0
      %p152 = por %p150, %p151
      %p153 = scmp.ne.s32.totalorder %s139, %s140
      %p154 = scmp.eq.s32.totalorder %s22, 1
      %p155 = por %p153, %p154
      %p157 = scmp.ne.s32.totalorder %s140, %s156
      %p158 = scmp.eq.s32.totalorder %s22, 0
      %p159 = por %p157, %p158
      %p160 = scmp.le.s32.totalorder 1, %s16
      %p161 = scmp.lt.s32.totalorder %s16, 3
      %p162 = pnand %p160, %p161
      %p163 = pneg %p162
      // Predicated region
      $region9: #{tpu_custom_call.1} parent=5 // pred_check
        _
      $region10: #{tpu_custom_call.1} parent=5 // pred_check_branch
        %165 = sbr.rel (%p162) target = $region12
      $region11: #{tpu_custom_call.1} parent=5 // pred_region
        %s166 = ssub.s32 %s16, 1
        // Predicated region
        $region13: #{tpu_custom_call.1} parent=11 // pred_check
          %p167 = pneg %p63
        $region14: #{tpu_custom_call.1} parent=11 // pred_check_branch
          %169 = sbr.rel (%p167) target = $region16
        $region15: #{tpu_custom_call.1} parent=11 // pred_region
          %171 = vsyncadd [#allocation4], 0
          %s172 = sshll.u32 %s1, 4
          %s173 = int_to_ptr.hbm [resolvable:$true] %s172
          %s174 = sshll.u32 [#allocation3], 4
          %s175 = int_to_ptr.vmem [resolvable:$true] %s174
          %180 = dma.hbm_to_vmem [thread:$0]  %s173, 9216, %s175, [#allocation4], 64, 64, 4
        $region16: #{tpu_custom_call.1} parent=11 // pred_fallthru
          _
        // Predicated region
        $region17: #{tpu_custom_call.1} parent=11 // pred_check
          %p181 = pneg %p84
        $region18: #{tpu_custom_call.1} parent=11 // pred_check_branch
          %183 = sbr.rel (%p181) target = $region20
        $region19: #{tpu_custom_call.1} parent=11 // pred_region
          _
        $region20: #{tpu_custom_call.1} parent=11 // pred_fallthru
          _
        // Predicated region
        $region21: #{tpu_custom_call.1} parent=11 // pred_check
          %p184 = pneg %p105
        $region22: #{tpu_custom_call.1} parent=11 // pred_check_branch
          %186 = sbr.rel (%p184) target = $region24
        $region23: #{tpu_custom_call.1} parent=11 // pred_region
          %188 = vsyncadd [#allocation7], 0
          %s189 = sshll.u32 %s3, 4
          %s190 = int_to_ptr.hbm [resolvable:$true] %s189
          %s191 = sshll.u32 [#allocation6], 4
          %s192 = int_to_ptr.vmem [resolvable:$true] %s191
          %197 = dma.hbm_to_vmem [thread:$0]  %s190, 9216, %s192, [#allocation7], 64, 64, 4
        $region24: #{tpu_custom_call.1} parent=11 // pred_fallthru
          _
        // Predicated region
        $region25: #{tpu_custom_call.1} parent=11 // pred_check
          %p198 = pneg %p126
        $region26: #{tpu_custom_call.1} parent=11 // pred_check_branch
          %200 = sbr.rel (%p198) target = $region28
        $region27: #{tpu_custom_call.1} parent=11 // pred_region
          _
        $region28: #{tpu_custom_call.1} parent=11 // pred_fallthru
          _
      $region12: #{tpu_custom_call.1} parent=5 // pred_fallthru
        _
      %p201 = scmp.lt.s32.totalorder %s16, 2
      // Predicated region
      $region29: #{tpu_custom_call.1} parent=5 // pred_check
        %p202 = pneg %p201
      $region30: #{tpu_custom_call.1} parent=5 // pred_check_branch
        %204 = sbr.rel (%p202) target = $region32
      $region31: #{tpu_custom_call.1} parent=5 // pred_region
        // Predicated region
        $region33: #{tpu_custom_call.1} parent=31 // pred_check
          %p205 = pneg %p36
        $region34: #{tpu_custom_call.1} parent=31 // pred_check_branch
          %207 = sbr.rel (%p205) target = $region36
        $region35: #{tpu_custom_call.1} parent=31 // pred_region
          %p208 = scmp.lt.s32.totalorder %s16, 1
          %s209 = scalar_select %p208, %s16, 1
          %s210 = smul.addr %s209, 20
          %s211 = smul.addr %s210, 8
          %s212 = scalar_lea.vmem %s0, %s211
        $region36: #{tpu_custom_call.1} parent=31 // pred_fallthru
          _
      $region32: #{tpu_custom_call.1} parent=5 // pred_fallthru
        _
      %p213 = scmp.le.s32.totalorder 1, %s16
      %p214 = scmp.lt.s32.totalorder %s16, 3
      %p215 = pnand %p213, %p214
      %p216 = pneg %p215
      // Predicated region
      $region37: #{tpu_custom_call.1} parent=5 // pred_check
        _
      $region38: #{tpu_custom_call.1} parent=5 // pred_check_branch
        %218 = sbr.rel (%p215) target = $region40
      $region39: #{tpu_custom_call.1} parent=5 // pred_region
        %s219 = ssub.s32 %s16, 1
        // Predicated region
        $region41: #{tpu_custom_call.1} parent=39 // pred_check
          %p220 = pneg %p63
        $region42: #{tpu_custom_call.1} parent=39 // pred_check_branch
          %222 = sbr.rel (%p220) target = $region44
        $region43: #{tpu_custom_call.1} parent=39 // pred_region
          %224 = dma.done [#allocation4], 9216
        $region44: #{tpu_custom_call.1} parent=39 // pred_fallthru
          _
        // Predicated region
        $region45: #{tpu_custom_call.1} parent=39 // pred_check
          %p225 = pneg %p105
        $region46: #{tpu_custom_call.1} parent=39 // pred_check_branch
          %227 = sbr.rel (%p225) target = $region48
        $region47: #{tpu_custom_call.1} parent=39 // pred_region
          %229 = dma.done [#allocation7], 9216
        $region48: #{tpu_custom_call.1} parent=39 // pred_fallthru
          _
        %p230 = scmp.lt.s32.totalorder %s21, 1
        %s231 = scalar_select %p230, %s21, 1
        %s232 = smul.addr %s231, 20
        %s233 = smul.addr %s232, 8
        %s234 = scalar_lea.vmem %s0, %s233
        %p235 = pneg %p42
        %p236 = pneg %p39
        %p237 = pneg %p63
        %p238 = pneg %p60
        %p239 = pneg %p84
        %p240 = pneg %p81
        %p241 = pneg %p105
        %p242 = pneg %p102
        %p243 = pneg %p126
        %p244 = pneg %p123
        %p245 = pneg %p152
        %p246 = pneg %p149
        %s247 = sand.u32 %s139, 1
        %s248 = scalar_lea.sflag [#allocation5], %s247
        %s249 = sand.u32 %s139, 1
        %s250 = smul.addr %s249, 64
        %s251 = scalar_lea.vmem [#allocation8], %s250
        %p252 = scmp.lt.s32.totalorder %s21, 1
        %s253 = scalar_select %p252, %s21, 1
        %s254 = smul.addr %s253, 20
        %s255 = smul.addr %s254, 8
        %s256 = scalar_lea.vmem %s0, %s255
        %v258 = vld [vmem:[%s256] sm:$0xff]
        %v259 = vld [vmem:[%s256 + $0x8] sm:$0x3]
        %v260 = vld [vmem:[%s256 + $0x10] sm:$0xff]
        %v261 = vld [vmem:[%s256 + $0x18] sm:$0x3]
        %v262 = vld [vmem:[%s256 + $0x20] sm:$0xff]
        %v263 = vld [vmem:[%s256 + $0x28] sm:$0x3]
        %v264 = vld [vmem:[%s256 + $0x30] sm:$0xff]
        %v265 = vld [vmem:[%s256 + $0x38] sm:$0x3]
        %v266 = vld [vmem:[%s256 + $0x40] sm:$0xff]
        %v267 = vld [vmem:[%s256 + $0x48] sm:$0x3]
        %v268 = vld [vmem:[%s256 + $0x50] sm:$0xff]
        %v269 = vld [vmem:[%s256 + $0x58] sm:$0x3]
        %v270 = vld [vmem:[%s256 + $0x60] sm:$0xff]
        %v271 = vld [vmem:[%s256 + $0x68] sm:$0x3]
        %v272 = vld [vmem:[%s256 + $0x70] sm:$0xff]
        %v273 = vld [vmem:[%s256 + $0x78] sm:$0x3]
        %v274 = vld [vmem:[%s256 + $0x80] sm:$0xff]
        %v275 = vld [vmem:[%s256 + $0x88] sm:$0x3]
        %v276 = vld [vmem:[%s256 + $0x90] sm:$0xff]
        %v277 = vld [vmem:[%s256 + $0x98] sm:$0x3]
        %v278 = vmax.f32 %v258, 0.0
        %v279 = vmax.f32 %v259, 0.0
        %v280 = vmax.f32 %v260, 0.0
        %v281 = vmax.f32 %v261, 0.0
        %v282 = vmax.f32 %v262, 0.0
        %v283 = vmax.f32 %v263, 0.0
        %v284 = vmax.f32 %v264, 0.0
        %v285 = vmax.f32 %v265, 0.0
        %v286 = vmax.f32 %v266, 0.0
        %v287 = vmax.f32 %v267, 0.0
        %v288 = vmax.f32 %v268, 0.0
        %v289 = vmax.f32 %v269, 0.0
        %v290 = vmax.f32 %v270, 0.0
        %v291 = vmax.f32 %v271, 0.0
        %v292 = vmax.f32 %v272, 0.0
        %v293 = vmax.f32 %v273, 0.0
        %v294 = vmax.f32 %v274, 0.0
        %v295 = vmax.f32 %v275, 0.0
        %v296 = vmax.f32 %v276, 0.0
        %v297 = vmax.f32 %v277, 0.0
        %v298 = vpack.c.bf16 %v278, %v278
        %v299 = vpack.c.bf16 %v279, %v279
        %v300 = vpack.c.bf16 %v280, %v280
        %v301 = vpack.c.bf16 %v281, %v281
        %v302 = vpack.c.bf16 %v282, %v282
        %v303 = vpack.c.bf16 %v283, %v283
        %v304 = vpack.c.bf16 %v284, %v284
        %v305 = vpack.c.bf16 %v285, %v285
        %v306 = vpack.c.bf16 %v286, %v286
        %v307 = vpack.c.bf16 %v287, %v287
        %v308 = vpack.c.bf16 %v288, %v288
        %v309 = vpack.c.bf16 %v289, %v289
        %v310 = vpack.c.bf16 %v290, %v290
        %v311 = vpack.c.bf16 %v291, %v291
        %v312 = vpack.c.bf16 %v292, %v292
        %v313 = vpack.c.bf16 %v293, %v293
        %v314 = vpack.c.bf16 %v294, %v294
        %v315 = vpack.c.bf16 %v295, %v295
        %v316 = vpack.c.bf16 %v296, %v296
        %v317 = vpack.c.bf16 %v297, %v297
        %vm318 = vsmask.f32 3328
        %vm319 = vsmask.f32 7440
        %vm320 = vmor %vm318, %vm319
        %v322 = vshrl.u32 %v298, 16
        %v324 = vrot.slane %v322, 4
        %v325 = vshll.u32 %v298, 16
        %v327 = vrot.slane %v325, 5
        %v328 = vor.u32 %v324, %v327
        %v329 = vrot.slane %v328, 4
        %v331 = vshll.u32 %v299, 16
        %v333 = vrot.slane %v331, 5
        %v334 = vsel %vm320, %v329, %v333
        %v336 = vshrl.u32 %v300, 16
        %v338 = vrot.slane %v336, 4
        %v339 = vshll.u32 %v300, 16
        %v341 = vrot.slane %v339, 5
        %v342 = vor.u32 %v338, %v341
        %v343 = vrot.slane %v342, 4
        %v345 = vshll.u32 %v301, 16
        %v347 = vrot.slane %v345, 5
        %v348 = vsel %vm320, %v343, %v347
        %v350 = vshrl.u32 %v302, 16
        %v352 = vrot.slane %v350, 4
        %v353 = vshll.u32 %v302, 16
        %v355 = vrot.slane %v353, 5
        %v356 = vor.u32 %v352, %v355
        %v357 = vrot.slane %v356, 4
        %v359 = vshll.u32 %v303, 16
        %v361 = vrot.slane %v359, 5
        %v362 = vsel %vm320, %v357, %v361
        %v364 = vshrl.u32 %v304, 16
        %v366 = vrot.slane %v364, 4
        %v367 = vshll.u32 %v304, 16
        %v369 = vrot.slane %v367, 5
        %v370 = vor.u32 %v366, %v369
        %v371 = vrot.slane %v370, 4
        %v373 = vshll.u32 %v305, 16
        %v375 = vrot.slane %v373, 5
        %v376 = vsel %vm320, %v371, %v375
        %v378 = vshrl.u32 %v306, 16
        %v380 = vrot.slane %v378, 4
        %v381 = vshll.u32 %v306, 16
        %v383 = vrot.slane %v381, 5
        %v384 = vor.u32 %v380, %v383
        %v385 = vrot.slane %v384, 4
        %v387 = vshll.u32 %v307, 16
        %v389 = vrot.slane %v387, 5
        %v390 = vsel %vm320, %v385, %v389
        %v392 = vshrl.u32 %v308, 16
        %v394 = vrot.slane %v392, 4
        %v395 = vshll.u32 %v308, 16
        %v397 = vrot.slane %v395, 5
        %v398 = vor.u32 %v394, %v397
        %v399 = vrot.slane %v398, 4
        %v401 = vshll.u32 %v309, 16
        %v403 = vrot.slane %v401, 5
        %v404 = vsel %vm320, %v399, %v403
        %v406 = vshrl.u32 %v310, 16
        %v408 = vrot.slane %v406, 4
        %v409 = vshll.u32 %v310, 16
        %v411 = vrot.slane %v409, 5
        %v412 = vor.u32 %v408, %v411
        %v413 = vrot.slane %v412, 4
        %v415 = vshll.u32 %v311, 16
        %v417 = vrot.slane %v415, 5
        %v418 = vsel %vm320, %v413, %v417
        %v420 = vshrl.u32 %v312, 16
        %v422 = vrot.slane %v420, 4
        %v423 = vshll.u32 %v312, 16
        %v425 = vrot.slane %v423, 5
        %v426 = vor.u32 %v422, %v425
        %v427 = vrot.slane %v426, 4
        %v429 = vshll.u32 %v313, 16
        %v431 = vrot.slane %v429, 5
        %v432 = vsel %vm320, %v427, %v431
        %vm449 = vcmask 1042432
        %vm450 = vcmask 1046532
        %vm451 = vmor %vm449, %vm450
        %v452 = vrot.slane %v298, 5
        %v453 = vrot.slane %v452, 4
        %v454 = vrot.slane %v299, 5
        %v455 = vsel %vm451, %v453, %v454
        %v456 = vrot.slane %v300, 5
        %v457 = vrot.slane %v456, 4
        %v458 = vrot.slane %v301, 5
        %v459 = vsel %vm451, %v457, %v458
        %v460 = vrot.slane %v302, 5
        %v461 = vrot.slane %v460, 4
        %v462 = vrot.slane %v303, 5
        %v463 = vsel %vm451, %v461, %v462
        %v464 = vrot.slane %v304, 5
        %v465 = vrot.slane %v464, 4
        %v466 = vrot.slane %v305, 5
        %v467 = vsel %vm451, %v465, %v466
        %v468 = vrot.slane %v306, 5
        %v469 = vrot.slane %v468, 4
        %v470 = vrot.slane %v307, 5
        %v471 = vsel %vm451, %v469, %v470
        %v472 = vrot.slane %v308, 5
        %v473 = vrot.slane %v472, 4
        %v474 = vrot.slane %v309, 5
        %v475 = vsel %vm451, %v473, %v474
        %v476 = vrot.slane %v310, 5
        %v477 = vrot.slane %v476, 4
        %v478 = vrot.slane %v311, 5
        %v479 = vsel %vm451, %v477, %v478
        %v480 = vrot.slane %v312, 5
        %v481 = vrot.slane %v480, 4
        %v482 = vrot.slane %v313, 5
        %v483 = vsel %vm451, %v481, %v482
        %v485 = vshrl.u32 %v314, 16
        %v487 = vrot.slane %v485, 4
        %v488 = vshll.u32 %v314, 16
        %v490 = vrot.slane %v488, 5
        %v491 = vor.u32 %v487, %v490
        %v492 = vrot.slane %v491, 4
        %v494 = vshll.u32 %v315, 16
        %v496 = vrot.slane %v494, 5
        %v497 = vsel %vm320, %v492, %v496
        %v500 = vrot.slane %v314, 5
        %v501 = vrot.slane %v500, 4
        %v502 = vrot.slane %v315, 5
        %v503 = vsel %vm451, %v501, %v502
        %v505 = vshrl.u32 %v316, 16
        %v507 = vrot.slane %v505, 4
        %v508 = vshll.u32 %v316, 16
        %v510 = vrot.slane %v508, 5
        %v511 = vor.u32 %v507, %v510
        %v512 = vrot.slane %v511, 4
        %v514 = vshll.u32 %v317, 16
        %v516 = vrot.slane %v514, 5
        %v517 = vsel %vm320, %v512, %v516
        %v520 = vrot.slane %v316, 5
        %v521 = vrot.slane %v520, 4
        %v522 = vrot.slane %v317, 5
        %v523 = vsel %vm451, %v521, %v522
        %v524 = vunpack.c.l.b16 %v298
        %v525 = vunpack.c.l.b16 %v300
        %v526 = vunpack.c.l.b16 %v302
        %v527 = vunpack.c.l.b16 %v304
        %v528 = vunpack.c.l.b16 %v306
        %v529 = vunpack.c.l.b16 %v308
        %v530 = vunpack.c.l.b16 %v310
        %v531 = vunpack.c.l.b16 %v312
        %v532 = vpack.c.b16 %v525, %v524
        %v533 = vpack.c.b16 %v527, %v526
        %v534 = vpack.c.b16 %v529, %v528
        %v535 = vpack.c.b16 %v531, %v530
        %v540 = vunpack.c.l.b16 %v334
        %v541 = vunpack.c.l.b16 %v348
        %v542 = vunpack.c.l.b16 %v362
        %v543 = vunpack.c.l.b16 %v376
        %v544 = vunpack.c.l.b16 %v390
        %v545 = vunpack.c.l.b16 %v404
        %v546 = vunpack.c.l.b16 %v418
        %v547 = vunpack.c.l.b16 %v432
        %v548 = vpack.c.b16 %v541, %v540
        %v549 = vpack.c.b16 %v543, %v542
        %v550 = vpack.c.b16 %v545, %v544
        %v551 = vpack.c.b16 %v547, %v546
        %v556 = vunpack.c.l.b16 %v455
        %v557 = vunpack.c.l.b16 %v459
        %v558 = vunpack.c.l.b16 %v463
        %v559 = vunpack.c.l.b16 %v467
        %v560 = vunpack.c.l.b16 %v471
        %v561 = vunpack.c.l.b16 %v475
        %v562 = vunpack.c.l.b16 %v479
        %v563 = vunpack.c.l.b16 %v483
        %v564 = vpack.c.b16 %v557, %v556
        %v565 = vpack.c.b16 %v559, %v558
        %v566 = vpack.c.b16 %v561, %v560
        %v567 = vpack.c.b16 %v563, %v562
        %v572 = vunpack.c.l.b16 %v314
        %v573 = vpack.c.b16 %v526, %v525
        %v574 = vpack.c.b16 %v528, %v527
        %v575 = vpack.c.b16 %v530, %v529
        %v576 = vpack.c.b16 %v572, %v531
        %v581 = vunpack.c.l.b16 %v497
        %v582 = vpack.c.b16 %v542, %v541
        %v583 = vpack.c.b16 %v544, %v543
        %v584 = vpack.c.b16 %v546, %v545
        %v585 = vpack.c.b16 %v581, %v547
        %v590 = vunpack.c.l.b16 %v503
        %v591 = vpack.c.b16 %v558, %v557
        %v592 = vpack.c.b16 %v560, %v559
        %v593 = vpack.c.b16 %v562, %v561
        %v594 = vpack.c.b16 %v590, %v563
        %v599 = vunpack.c.l.b16 %v316
        %v600 = vpack.c.b16 %v599, %v572
        %v602 = vunpack.c.l.b16 %v517
        %v603 = vpack.c.b16 %v602, %v581
        %v605 = vunpack.c.l.b16 %v523
        %v606 = vpack.c.b16 %v605, %v590
        %v608 = vld [vmem:[#allocation3] sm:$0xf]
        %v609 = vld [vmem:[#allocation3 + $0x4] sm:$0xf]
        %v610 = vld [vmem:[#allocation3 + $0x8] sm:$0xf]
        %v611 = vld [vmem:[#allocation3 + $0xc] sm:$0xf]
        %v612 = vld [vmem:[#allocation3 + $0x10] sm:$0xf]
        %v613 = vld [vmem:[#allocation3 + $0x14] sm:$0xf]
        %v614 = vld [vmem:[#allocation3 + $0x18] sm:$0xf]
        %v615 = vld [vmem:[#allocation3 + $0x1c] sm:$0xf]
        %v616 = vld [vmem:[#allocation3 + $0x20] sm:$0xf]
        %v617 = vld [vmem:[#allocation3 + $0x24] sm:$0xf]
        %v618 = vld [vmem:[#allocation3 + $0x28] sm:$0xf]
        %v619 = vld [vmem:[#allocation3 + $0x2c] sm:$0xf]
        %v620 = vld [vmem:[#allocation3 + $0x30] sm:$0xf]
        %v621 = vld [vmem:[#allocation3 + $0x34] sm:$0xf]
        %v622 = vld [vmem:[#allocation3 + $0x38] sm:$0xf]
        %v623 = vld [vmem:[#allocation3 + $0x3c] sm:$0xf]
        %v624 = vld [vmem:[#allocation3 + $0x40] sm:$0xf]
        %v625 = vld [vmem:[#allocation3 + $0x44] sm:$0xf]
        %v626 = vld [vmem:[#allocation3 + $0x48] sm:$0xf]
        %v627 = vld [vmem:[#allocation3 + $0x4c] sm:$0xf]
        %v628 = vld [vmem:[#allocation3 + $0x50] sm:$0xf]
        %v629 = vld [vmem:[#allocation3 + $0x54] sm:$0xf]
        %v630 = vld [vmem:[#allocation3 + $0x58] sm:$0xf]
        %v631 = vld [vmem:[#allocation3 + $0x5c] sm:$0xf]
        %v632 = vld [vmem:[#allocation3 + $0x60] sm:$0xf]
        %v633 = vld [vmem:[#allocation3 + $0x64] sm:$0xf]
        %v634 = vld [vmem:[#allocation3 + $0x68] sm:$0xf]
        %v635 = vld [vmem:[#allocation3 + $0x6c] sm:$0xf]
        %v636 = vld [vmem:[#allocation3 + $0x70] sm:$0xf]
        %v637 = vld [vmem:[#allocation3 + $0x74] sm:$0xf]
        %v638 = vld [vmem:[#allocation3 + $0x78] sm:$0xf]
        %v639 = vld [vmem:[#allocation3 + $0x7c] sm:$0xf]
        %v640 = vld [vmem:[#allocation3 + $0x80] sm:$0xf]
        %v641 = vld [vmem:[#allocation3 + $0x84] sm:$0xf]
        %v642 = vld [vmem:[#allocation3 + $0x88] sm:$0xf]
        %v643 = vld [vmem:[#allocation3 + $0x8c] sm:$0xf]
        %v644 = vld [vmem:[#allocation3 + $0x90] sm:$0xf]
        %v645 = vld [vmem:[#allocation3 + $0x94] sm:$0xf]
        %v646 = vld [vmem:[#allocation3 + $0x98] sm:$0xf]
        %v647 = vld [vmem:[#allocation3 + $0x9c] sm:$0xf]
        %v648 = vld [vmem:[#allocation3 + $0xa0] sm:$0xf]
        %v649 = vld [vmem:[#allocation3 + $0xa4] sm:$0xf]
        %v650 = vld [vmem:[#allocation3 + $0xa8] sm:$0xf]
        %v651 = vld [vmem:[#allocation3 + $0xac] sm:$0xf]
        %v652 = vld [vmem:[#allocation3 + $0xb0] sm:$0xf]
        %v653 = vld [vmem:[#allocation3 + $0xb4] sm:$0xf]
        %v654 = vld [vmem:[#allocation3 + $0xb8] sm:$0xf]
        %v655 = vld [vmem:[#allocation3 + $0xbc] sm:$0xf]
        %v656 = vld [vmem:[#allocation3 + $0xc0] sm:$0xf]
        %v657 = vld [vmem:[#allocation3 + $0xc4] sm:$0xf]
        %v658 = vld [vmem:[#allocation3 + $0xc8] sm:$0xf]
        %v659 = vld [vmem:[#allocation3 + $0xcc] sm:$0xf]
        %v660 = vld [vmem:[#allocation3 + $0xd0] sm:$0xf]
        %v661 = vld [vmem:[#allocation3 + $0xd4] sm:$0xf]
        %v662 = vld [vmem:[#allocation3 + $0xd8] sm:$0xf]
        %v663 = vld [vmem:[#allocation3 + $0xdc] sm:$0xf]
        %v664 = vld [vmem:[#allocation3 + $0xe0] sm:$0xf]
        %v665 = vld [vmem:[#allocation3 + $0xe4] sm:$0xf]
        %v666 = vld [vmem:[#allocation3 + $0xe8] sm:$0xf]
        %v667 = vld [vmem:[#allocation3 + $0xec] sm:$0xf]
        %v668 = vld [vmem:[#allocation3 + $0xf0] sm:$0xf]
        %v669 = vld [vmem:[#allocation3 + $0xf4] sm:$0xf]
        %v670 = vld [vmem:[#allocation3 + $0xf8] sm:$0xf]
        %v671 = vld [vmem:[#allocation3 + $0xfc] sm:$0xf]
        %v672 = vld [vmem:[#allocation3 + $0x100] sm:$0xf]
        %v673 = vld [vmem:[#allocation3 + $0x104] sm:$0xf]
        %v674 = vld [vmem:[#allocation3 + $0x108] sm:$0xf]
        %v675 = vld [vmem:[#allocation3 + $0x10c] sm:$0xf]
        %v676 = vld [vmem:[#allocation3 + $0x110] sm:$0xf]
        %v677 = vld [vmem:[#allocation3 + $0x114] sm:$0xf]
        %v678 = vld [vmem:[#allocation3 + $0x118] sm:$0xf]
        %v679 = vld [vmem:[#allocation3 + $0x11c] sm:$0xf]
        %v680 = vld [vmem:[#allocation3 + $0x120] sm:$0xf]
        %v681 = vld [vmem:[#allocation3 + $0x124] sm:$0xf]
        %v682 = vld [vmem:[#allocation3 + $0x128] sm:$0xf]
        %v683 = vld [vmem:[#allocation3 + $0x12c] sm:$0xf]
        %v684 = vld [vmem:[#allocation3 + $0x130] sm:$0xf]
        %v685 = vld [vmem:[#allocation3 + $0x134] sm:$0xf]
        %v686 = vld [vmem:[#allocation3 + $0x138] sm:$0xf]
        %v687 = vld [vmem:[#allocation3 + $0x13c] sm:$0xf]
        %v688 = vld [vmem:[#allocation3 + $0x140] sm:$0xf]
        %v689 = vld [vmem:[#allocation3 + $0x144] sm:$0xf]
        %v690 = vld [vmem:[#allocation3 + $0x148] sm:$0xf]
        %v691 = vld [vmem:[#allocation3 + $0x14c] sm:$0xf]
        %v692 = vld [vmem:[#allocation3 + $0x150] sm:$0xf]
        %v693 = vld [vmem:[#allocation3 + $0x154] sm:$0xf]
        %v694 = vld [vmem:[#allocation3 + $0x158] sm:$0xf]
        %v695 = vld [vmem:[#allocation3 + $0x15c] sm:$0xf]
        %v696 = vld [vmem:[#allocation3 + $0x160] sm:$0xf]
        %v697 = vld [vmem:[#allocation3 + $0x164] sm:$0xf]
        %v698 = vld [vmem:[#allocation3 + $0x168] sm:$0xf]
        %v699 = vld [vmem:[#allocation3 + $0x16c] sm:$0xf]
        %v700 = vld [vmem:[#allocation3 + $0x170] sm:$0xf]
        %v701 = vld [vmem:[#allocation3 + $0x174] sm:$0xf]
        %v702 = vld [vmem:[#allocation3 + $0x178] sm:$0xf]
        %v703 = vld [vmem:[#allocation3 + $0x17c] sm:$0xf]
        %v704 = vld [vmem:[#allocation3 + $0x180] sm:$0xf]
        %v705 = vld [vmem:[#allocation3 + $0x184] sm:$0xf]
        %v706 = vld [vmem:[#allocation3 + $0x188] sm:$0xf]
        %v707 = vld [vmem:[#allocation3 + $0x18c] sm:$0xf]
        %v708 = vld [vmem:[#allocation3 + $0x190] sm:$0xf]
        %v709 = vld [vmem:[#allocation3 + $0x194] sm:$0xf]
        %v710 = vld [vmem:[#allocation3 + $0x198] sm:$0xf]
        %v711 = vld [vmem:[#allocation3 + $0x19c] sm:$0xf]
        %v712 = vld [vmem:[#allocation3 + $0x1a0] sm:$0xf]
        %v713 = vld [vmem:[#allocation3 + $0x1a4] sm:$0xf]
        %v714 = vld [vmem:[#allocation3 + $0x1a8] sm:$0xf]
        %v715 = vld [vmem:[#allocation3 + $0x1ac] sm:$0xf]
        %v716 = vld [vmem:[#allocation3 + $0x1b0] sm:$0xf]
        %v717 = vld [vmem:[#allocation3 + $0x1b4] sm:$0xf]
        %v718 = vld [vmem:[#allocation3 + $0x1b8] sm:$0xf]
        %v719 = vld [vmem:[#allocation3 + $0x1bc] sm:$0xf]
        %v720 = vld [vmem:[#allocation3 + $0x1c0] sm:$0xf]
        %v721 = vld [vmem:[#allocation3 + $0x1c4] sm:$0xf]
        %v722 = vld [vmem:[#allocation3 + $0x1c8] sm:$0xf]
        %v723 = vld [vmem:[#allocation3 + $0x1cc] sm:$0xf]
        %v724 = vld [vmem:[#allocation3 + $0x1d0] sm:$0xf]
        %v725 = vld [vmem:[#allocation3 + $0x1d4] sm:$0xf]
        %v726 = vld [vmem:[#allocation3 + $0x1d8] sm:$0xf]
        %v727 = vld [vmem:[#allocation3 + $0x1dc] sm:$0xf]
        %v728 = vld [vmem:[#allocation3 + $0x1e0] sm:$0xf]
        %v729 = vld [vmem:[#allocation3 + $0x1e4] sm:$0xf]
        %v730 = vld [vmem:[#allocation3 + $0x1e8] sm:$0xf]
        %v731 = vld [vmem:[#allocation3 + $0x1ec] sm:$0xf]
        %v732 = vld [vmem:[#allocation3 + $0x1f0] sm:$0xf]
        %v733 = vld [vmem:[#allocation3 + $0x1f4] sm:$0xf]
        %v734 = vld [vmem:[#allocation3 + $0x1f8] sm:$0xf]
        %v735 = vld [vmem:[#allocation3 + $0x1fc] sm:$0xf]
        %v736 = vld [vmem:[#allocation3 + $0x200] sm:$0xf]
        %v737 = vld [vmem:[#allocation3 + $0x204] sm:$0xf]
        %v738 = vld [vmem:[#allocation3 + $0x208] sm:$0xf]
        %v739 = vld [vmem:[#allocation3 + $0x20c] sm:$0xf]
        %v740 = vld [vmem:[#allocation3 + $0x210] sm:$0xf]
        %v741 = vld [vmem:[#allocation3 + $0x214] sm:$0xf]
        %v742 = vld [vmem:[#allocation3 + $0x218] sm:$0xf]
        %v743 = vld [vmem:[#allocation3 + $0x21c] sm:$0xf]
        %v744 = vld [vmem:[#allocation3 + $0x220] sm:$0xf]
        %v745 = vld [vmem:[#allocation3 + $0x224] sm:$0xf]
        %v746 = vld [vmem:[#allocation3 + $0x228] sm:$0xf]
        %v747 = vld [vmem:[#allocation3 + $0x22c] sm:$0xf]
        %v748 = vld [vmem:[#allocation3 + $0x230] sm:$0xf]
        %v749 = vld [vmem:[#allocation3 + $0x234] sm:$0xf]
        %v750 = vld [vmem:[#allocation3 + $0x238] sm:$0xf]
        %v751 = vld [vmem:[#allocation3 + $0x23c] sm:$0xf]
        %v752 = vld [vmem:[%s2] sm:$0x1]
        %v754 = vperm.slane %v752, 0
        %v900 = vunpack.c.l.b16 %v608
        %v901 = vunpack.c.l.b16 %v609
        %v902 = vunpack.c.l.b16 %v610
        %v903 = vunpack.c.l.b16 %v611
        %v904 = vunpack.c.l.b16 %v612
        %v905 = vunpack.c.l.b16 %v613
        %v906 = vunpack.c.l.b16 %v614
        %v907 = vunpack.c.l.b16 %v615
        %v908 = vunpack.c.l.b16 %v616
        %v909 = vunpack.c.l.b16 %v617
        %v910 = vunpack.c.l.b16 %v618
        %v911 = vunpack.c.l.b16 %v619
        %v912 = vunpack.c.l.b16 %v620
        %v913 = vunpack.c.l.b16 %v621
        %v914 = vunpack.c.l.b16 %v622
        %v915 = vunpack.c.l.b16 %v623
        %v916 = vunpack.c.l.b16 %v624
        %v917 = vunpack.c.l.b16 %v625
        %v918 = vunpack.c.l.b16 %v626
        %v919 = vunpack.c.l.b16 %v627
        %v920 = vunpack.c.l.b16 %v628
        %v921 = vunpack.c.l.b16 %v629
        %v922 = vunpack.c.l.b16 %v630
        %v923 = vunpack.c.l.b16 %v631
        %v924 = vunpack.c.l.b16 %v632
        %v925 = vunpack.c.l.b16 %v633
        %v926 = vunpack.c.l.b16 %v634
        %v927 = vunpack.c.l.b16 %v635
        %v928 = vunpack.c.l.b16 %v636
        %v929 = vunpack.c.l.b16 %v637
        %v930 = vunpack.c.l.b16 %v638
        %v931 = vunpack.c.l.b16 %v639
        %v932 = vunpack.c.l.b16 %v640
        %v933 = vunpack.c.l.b16 %v641
        %v934 = vunpack.c.l.b16 %v642
        %v935 = vunpack.c.l.b16 %v643
        %v936 = vunpack.c.l.b16 %v644
        %v937 = vunpack.c.l.b16 %v645
        %v938 = vunpack.c.l.b16 %v646
        %v939 = vunpack.c.l.b16 %v647
        %v940 = vunpack.c.l.b16 %v648
        %v941 = vunpack.c.l.b16 %v649
        %v942 = vunpack.c.l.b16 %v650
        %v943 = vunpack.c.l.b16 %v651
        %v944 = vunpack.c.l.b16 %v652
        %v945 = vunpack.c.l.b16 %v653
        %v946 = vunpack.c.l.b16 %v654
        %v947 = vunpack.c.l.b16 %v655
        %v948 = vunpack.c.l.b16 %v656
        %v949 = vunpack.c.l.b16 %v657
        %v950 = vunpack.c.l.b16 %v658
        %v951 = vunpack.c.l.b16 %v659
        %v952 = vunpack.c.l.b16 %v660
        %v953 = vunpack.c.l.b16 %v661
        %v954 = vunpack.c.l.b16 %v662
        %v955 = vunpack.c.l.b16 %v663
        %v956 = vunpack.c.l.b16 %v664
        %v957 = vunpack.c.l.b16 %v665
        %v958 = vunpack.c.l.b16 %v666
        %v959 = vunpack.c.l.b16 %v667
        %v960 = vunpack.c.l.b16 %v668
        %v961 = vunpack.c.l.b16 %v669
        %v962 = vunpack.c.l.b16 %v670
        %v963 = vunpack.c.l.b16 %v671
        %v964 = vunpack.c.l.b16 %v672
        %v965 = vunpack.c.l.b16 %v673
        %v966 = vunpack.c.l.b16 %v674
        %v967 = vunpack.c.l.b16 %v675
        %v968 = vunpack.c.l.b16 %v676
        %v969 = vunpack.c.l.b16 %v677
        %v970 = vunpack.c.l.b16 %v678
        %v971 = vunpack.c.l.b16 %v679
        %v972 = vunpack.c.l.b16 %v680
        %v973 = vunpack.c.l.b16 %v681
        %v974 = vunpack.c.l.b16 %v682
        %v975 = vunpack.c.l.b16 %v683
        %v976 = vunpack.c.l.b16 %v684
        %v977 = vunpack.c.l.b16 %v685
        %v978 = vunpack.c.l.b16 %v686
        %v979 = vunpack.c.l.b16 %v687
        %v980 = vunpack.c.l.b16 %v688
        %v981 = vunpack.c.l.b16 %v689
        %v982 = vunpack.c.l.b16 %v690
        %v983 = vunpack.c.l.b16 %v691
        %v984 = vunpack.c.l.b16 %v692
        %v985 = vunpack.c.l.b16 %v693
        %v986 = vunpack.c.l.b16 %v694
        %v987 = vunpack.c.l.b16 %v695
        %v988 = vunpack.c.l.b16 %v696
        %v989 = vunpack.c.l.b16 %v697
        %v990 = vunpack.c.l.b16 %v698
        %v991 = vunpack.c.l.b16 %v699
        %v992 = vunpack.c.l.b16 %v700
        %v993 = vunpack.c.l.b16 %v701
        %v994 = vunpack.c.l.b16 %v702
        %v995 = vunpack.c.l.b16 %v703
        %v996 = vunpack.c.l.b16 %v704
        %v997 = vunpack.c.l.b16 %v705
        %v998 = vunpack.c.l.b16 %v706
        %v999 = vunpack.c.l.b16 %v707
        %v1000 = vunpack.c.l.b16 %v708
        %v1001 = vunpack.c.l.b16 %v709
        %v1002 = vunpack.c.l.b16 %v710
        %v1003 = vunpack.c.l.b16 %v711
        %v1004 = vunpack.c.l.b16 %v712
        %v1005 = vunpack.c.l.b16 %v713
        %v1006 = vunpack.c.l.b16 %v714
        %v1007 = vunpack.c.l.b16 %v715
        %v1008 = vunpack.c.l.b16 %v716
        %v1009 = vunpack.c.l.b16 %v717
        %v1010 = vunpack.c.l.b16 %v718
        %v1011 = vunpack.c.l.b16 %v719
        %v1012 = vunpack.c.l.b16 %v720
        %v1013 = vunpack.c.l.b16 %v721
        %v1014 = vunpack.c.l.b16 %v722
        %v1015 = vunpack.c.l.b16 %v723
        %v1016 = vunpack.c.l.b16 %v724
        %v1017 = vunpack.c.l.b16 %v725
        %v1018 = vunpack.c.l.b16 %v726
        %v1019 = vunpack.c.l.b16 %v727
        %v1020 = vunpack.c.l.b16 %v728
        %v1021 = vunpack.c.l.b16 %v729
        %v1022 = vunpack.c.l.b16 %v730
        %v1023 = vunpack.c.l.b16 %v731
        %v1024 = vunpack.c.l.b16 %v732
        %v1025 = vunpack.c.l.b16 %v733
        %v1026 = vunpack.c.l.b16 %v734
        %v1027 = vunpack.c.l.b16 %v735
        %v1028 = vunpack.c.l.b16 %v736
        %v1029 = vunpack.c.l.b16 %v737
        %v1030 = vunpack.c.l.b16 %v738
        %v1031 = vunpack.c.l.b16 %v739
        %v1032 = vunpack.c.l.b16 %v740
        %v1033 = vunpack.c.l.b16 %v741
        %v1034 = vunpack.c.l.b16 %v742
        %v1035 = vunpack.c.l.b16 %v743
        %v1036 = vunpack.c.l.b16 %v744
        %v1037 = vunpack.c.l.b16 %v745
        %v1038 = vunpack.c.l.b16 %v746
        %v1039 = vunpack.c.l.b16 %v747
        %v1040 = vunpack.c.l.b16 %v748
        %v1041 = vunpack.c.l.b16 %v749
        %v1042 = vunpack.c.l.b16 %v750
        %v1043 = vunpack.c.l.b16 %v751
        %v1044 = vpack.c.b16 %v901, %v900
        %v1045 = vpack.c.b16 %v903, %v902
        %v1046 = vpack.c.b16 %v905, %v904
        %v1047 = vpack.c.b16 %v907, %v906
        %v1048 = vpack.c.b16 %v909, %v908
        %v1049 = vpack.c.b16 %v911, %v910
        %v1050 = vpack.c.b16 %v913, %v912
        %v1051 = vpack.c.b16 %v915, %v914
        %v1052 = vpack.c.b16 %v917, %v916
        %v1053 = vpack.c.b16 %v919, %v918
        %v1054 = vpack.c.b16 %v921, %v920
        %v1055 = vpack.c.b16 %v923, %v922
        %v1056 = vpack.c.b16 %v925, %v924
        %v1057 = vpack.c.b16 %v927, %v926
        %v1058 = vpack.c.b16 %v929, %v928
        %v1059 = vpack.c.b16 %v931, %v930
        %v1060 = vpack.c.b16 %v933, %v932
        %v1061 = vpack.c.b16 %v935, %v934
        %v1062 = vpack.c.b16 %v937, %v936
        %v1063 = vpack.c.b16 %v939, %v938
        %v1064 = vpack.c.b16 %v941, %v940
        %v1065 = vpack.c.b16 %v943, %v942
        %v1066 = vpack.c.b16 %v945, %v944
        %v1067 = vpack.c.b16 %v947, %v946
        %v1068 = vpack.c.b16 %v949, %v948
        %v1069 = vpack.c.b16 %v951, %v950
        %v1070 = vpack.c.b16 %v953, %v952
        %v1071 = vpack.c.b16 %v955, %v954
        %v1072 = vpack.c.b16 %v957, %v956
        %v1073 = vpack.c.b16 %v959, %v958
        %v1074 = vpack.c.b16 %v961, %v960
        %v1075 = vpack.c.b16 %v963, %v962
        %v1076 = vpack.c.b16 %v965, %v964
        %v1077 = vpack.c.b16 %v967, %v966
        %v1078 = vpack.c.b16 %v969, %v968
        %v1079 = vpack.c.b16 %v971, %v970
        %v1080 = vpack.c.b16 %v973, %v972
        %v1081 = vpack.c.b16 %v975, %v974
        %v1082 = vpack.c.b16 %v977, %v976
        %v1083 = vpack.c.b16 %v979, %v978
        %v1084 = vpack.c.b16 %v981, %v980
        %v1085 = vpack.c.b16 %v983, %v982
        %v1086 = vpack.c.b16 %v985, %v984
        %v1087 = vpack.c.b16 %v987, %v986
        %v1088 = vpack.c.b16 %v989, %v988
        %v1089 = vpack.c.b16 %v991, %v990
        %v1090 = vpack.c.b16 %v993, %v992
        %v1091 = vpack.c.b16 %v995, %v994
        %v1092 = vpack.c.b16 %v997, %v996
        %v1093 = vpack.c.b16 %v999, %v998
        %v1094 = vpack.c.b16 %v1001, %v1000
        %v1095 = vpack.c.b16 %v1003, %v1002
        %v1096 = vpack.c.b16 %v1005, %v1004
        %v1097 = vpack.c.b16 %v1007, %v1006
        %v1098 = vpack.c.b16 %v1009, %v1008
        %v1099 = vpack.c.b16 %v1011, %v1010
        %v1100 = vpack.c.b16 %v1013, %v1012
        %v1101 = vpack.c.b16 %v1015, %v1014
        %v1102 = vpack.c.b16 %v1017, %v1016
        %v1103 = vpack.c.b16 %v1019, %v1018
        %v1104 = vpack.c.b16 %v1021, %v1020
        %v1105 = vpack.c.b16 %v1023, %v1022
        %v1106 = vpack.c.b16 %v1025, %v1024
        %v1107 = vpack.c.b16 %v1027, %v1026
        %v1108 = vpack.c.b16 %v1029, %v1028
        %v1109 = vpack.c.b16 %v1031, %v1030
        %v1110 = vpack.c.b16 %v1033, %v1032
        %v1111 = vpack.c.b16 %v1035, %v1034
        %v1112 = vpack.c.b16 %v1037, %v1036
        %v1113 = vpack.c.b16 %v1039, %v1038
        %v1114 = vpack.c.b16 %v1041, %v1040
        %v1115 = vpack.c.b16 %v1043, %v1042
        %1188 = vmatpush.bf16.msra.mxu0 %v1051
        %1189 = vmatpush.bf16.msra.mxu0 %v1050
        %1190 = vmatpush.bf16.msra.mxu0 %v1049
        %1191 = vmatpush.bf16.msra.mxu0 %v1048
        %1192 = vmatpush.bf16.msra.mxu0 %v1047
        %1193 = vmatpush.bf16.msra.mxu0 %v1046
        %1194 = vmatpush.bf16.msra.mxu0 %v1045
        %1195 = vmatpush.bf16.msra.mxu0 %v1044
        %1196 = vmatmul.bf16.gmra.mxu0 %v532
        %v1197 = vpop.f32.mrf.mxu0
        %v1198 = vadd.f32 %v754, %v1197
        %v1199 = vpop.f32.mrf.mxu0
        %v1200 = vadd.f32 %v754, %v1199
        %1201 = vmatmul.bf16.gmra.mxu0 %v533
        %v1202 = vpop.f32.mrf.mxu0
        %v1203 = vadd.f32 %v754, %v1202
        %v1204 = vpop.f32.mrf.mxu0
        %v1205 = vadd.f32 %v754, %v1204
        %1206 = vmatmul.bf16.gmra.mxu0 %v534
        %v1207 = vpop.f32.mrf.mxu0
        %v1208 = vadd.f32 %v754, %v1207
        %v1209 = vpop.f32.mrf.mxu0
        %v1210 = vadd.f32 %v754, %v1209
        %1211 = vmatmul.bf16.gmra.mxu0 %v535
        %v1212 = vpop.f32.mrf.mxu0
        %v1213 = vadd.f32 %v754, %v1212
        %v1214 = vpop.f32.mrf.mxu0
        %v1215 = vadd.f32 %v754, %v1214
        %1216 = vdwg.mxu0
        %1217 = vmatpush.bf16.msra.mxu0 %v1059
        %1218 = vmatpush.bf16.msra.mxu0 %v1058
        %1219 = vmatpush.bf16.msra.mxu0 %v1057
        %1220 = vmatpush.bf16.msra.mxu0 %v1056
        %1221 = vmatpush.bf16.msra.mxu0 %v1055
        %1222 = vmatpush.bf16.msra.mxu0 %v1054
        %1223 = vmatpush.bf16.msra.mxu0 %v1053
        %1224 = vmatpush.bf16.msra.mxu0 %v1052
        %1225 = vmatmul.bf16.gmra.mxu0 %v548
        %v1226 = vpop.f32.mrf.mxu0
        %v1227 = vadd.f32 %v1198, %v1226
        %v1228 = vpop.f32.mrf.mxu0
        %v1229 = vadd.f32 %v1200, %v1228
        %1230 = vmatmul.bf16.gmra.mxu0 %v549
        %v1231 = vpop.f32.mrf.mxu0
        %v1232 = vadd.f32 %v1203, %v1231
        %v1233 = vpop.f32.mrf.mxu0
        %v1234 = vadd.f32 %v1205, %v1233
        %1235 = vmatmul.bf16.gmra.mxu0 %v550
        %v1236 = vpop.f32.mrf.mxu0
        %v1237 = vadd.f32 %v1208, %v1236
        %v1238 = vpop.f32.mrf.mxu0
        %v1239 = vadd.f32 %v1210, %v1238
        %1240 = vmatmul.bf16.gmra.mxu0 %v551
        %v1241 = vpop.f32.mrf.mxu0
        %v1242 = vadd.f32 %v1213, %v1241
        %v1243 = vpop.f32.mrf.mxu0
        %v1244 = vadd.f32 %v1215, %v1243
        %1245 = vdwg.mxu0
        %1246 = vmatpush.bf16.msra.mxu0 %v1067
        %1247 = vmatpush.bf16.msra.mxu0 %v1066
        %1248 = vmatpush.bf16.msra.mxu0 %v1065
        %1249 = vmatpush.bf16.msra.mxu0 %v1064
        %1250 = vmatpush.bf16.msra.mxu0 %v1063
        %1251 = vmatpush.bf16.msra.mxu0 %v1062
        %1252 = vmatpush.bf16.msra.mxu0 %v1061
        %1253 = vmatpush.bf16.msra.mxu0 %v1060
        %1254 = vmatmul.bf16.gmra.mxu0 %v564
        %v1255 = vpop.f32.mrf.mxu0
        %v1256 = vadd.f32 %v1227, %v1255
        %v1257 = vpop.f32.mrf.mxu0
        %v1258 = vadd.f32 %v1229, %v1257
        %1259 = vmatmul.bf16.gmra.mxu0 %v565
        %v1260 = vpop.f32.mrf.mxu0
        %v1261 = vadd.f32 %v1232, %v1260
        %v1262 = vpop.f32.mrf.mxu0
        %v1263 = vadd.f32 %v1234, %v1262
        %1264 = vmatmul.bf16.gmra.mxu0 %v566
        %v1265 = vpop.f32.mrf.mxu0
        %v1266 = vadd.f32 %v1237, %v1265
        %v1267 = vpop.f32.mrf.mxu0
        %v1268 = vadd.f32 %v1239, %v1267
        %1269 = vmatmul.bf16.gmra.mxu0 %v567
        %v1270 = vpop.f32.mrf.mxu0
        %v1271 = vadd.f32 %v1242, %v1270
        %v1272 = vpop.f32.mrf.mxu0
        %v1273 = vadd.f32 %v1244, %v1272
        %1274 = vdwg.mxu0
        %1275 = vmatpush.bf16.msra.mxu0 %v1075
        %1276 = vmatpush.bf16.msra.mxu0 %v1074
        %1277 = vmatpush.bf16.msra.mxu0 %v1073
        %1278 = vmatpush.bf16.msra.mxu0 %v1072
        %1279 = vmatpush.bf16.msra.mxu0 %v1071
        %1280 = vmatpush.bf16.msra.mxu0 %v1070
        %1281 = vmatpush.bf16.msra.mxu0 %v1069
        %1282 = vmatpush.bf16.msra.mxu0 %v1068
        %1283 = vmatmul.bf16.gmra.mxu0 %v573
        %v1284 = vpop.f32.mrf.mxu0
        %v1285 = vadd.f32 %v1256, %v1284
        %v1286 = vpop.f32.mrf.mxu0
        %v1287 = vadd.f32 %v1258, %v1286
        %1288 = vmatmul.bf16.gmra.mxu0 %v574
        %v1289 = vpop.f32.mrf.mxu0
        %v1290 = vadd.f32 %v1261, %v1289
        %v1291 = vpop.f32.mrf.mxu0
        %v1292 = vadd.f32 %v1263, %v1291
        %1293 = vmatmul.bf16.gmra.mxu0 %v575
        %v1294 = vpop.f32.mrf.mxu0
        %v1295 = vadd.f32 %v1266, %v1294
        %v1296 = vpop.f32.mrf.mxu0
        %v1297 = vadd.f32 %v1268, %v1296
        %1298 = vmatmul.bf16.gmra.mxu0 %v576
        %v1299 = vpop.f32.mrf.mxu0
        %v1300 = vadd.f32 %v1271, %v1299
        %v1301 = vpop.f32.mrf.mxu0
        %v1302 = vadd.f32 %v1273, %v1301
        %1303 = vdwg.mxu0
        %1304 = vmatpush.bf16.msra.mxu0 %v1083
        %1305 = vmatpush.bf16.msra.mxu0 %v1082
        %1306 = vmatpush.bf16.msra.mxu0 %v1081
        %1307 = vmatpush.bf16.msra.mxu0 %v1080
        %1308 = vmatpush.bf16.msra.mxu0 %v1079
        %1309 = vmatpush.bf16.msra.mxu0 %v1078
        %1310 = vmatpush.bf16.msra.mxu0 %v1077
        %1311 = vmatpush.bf16.msra.mxu0 %v1076
        %1312 = vmatmul.bf16.gmra.mxu0 %v582
        %v1313 = vpop.f32.mrf.mxu0
        %v1314 = vadd.f32 %v1285, %v1313
        %v1315 = vpop.f32.mrf.mxu0
        %v1316 = vadd.f32 %v1287, %v1315
        %1317 = vmatmul.bf16.gmra.mxu0 %v583
        %v1318 = vpop.f32.mrf.mxu0
        %v1319 = vadd.f32 %v1290, %v1318
        %v1320 = vpop.f32.mrf.mxu0
        %v1321 = vadd.f32 %v1292, %v1320
        %1322 = vmatmul.bf16.gmra.mxu0 %v584
        %v1323 = vpop.f32.mrf.mxu0
        %v1324 = vadd.f32 %v1295, %v1323
        %v1325 = vpop.f32.mrf.mxu0
        %v1326 = vadd.f32 %v1297, %v1325
        %1327 = vmatmul.bf16.gmra.mxu0 %v585
        %v1328 = vpop.f32.mrf.mxu0
        %v1329 = vadd.f32 %v1300, %v1328
        %v1330 = vpop.f32.mrf.mxu0
        %v1331 = vadd.f32 %v1302, %v1330
        %1332 = vdwg.mxu0
        %1333 = vmatpush.bf16.msra.mxu0 %v1091
        %1334 = vmatpush.bf16.msra.mxu0 %v1090
        %1335 = vmatpush.bf16.msra.mxu0 %v1089
        %1336 = vmatpush.bf16.msra.mxu0 %v1088
        %1337 = vmatpush.bf16.msra.mxu0 %v1087
        %1338 = vmatpush.bf16.msra.mxu0 %v1086
        %1339 = vmatpush.bf16.msra.mxu0 %v1085
        %1340 = vmatpush.bf16.msra.mxu0 %v1084
        %1341 = vmatmul.bf16.gmra.mxu0 %v591
        %v1342 = vpop.f32.mrf.mxu0
        %v1343 = vadd.f32 %v1314, %v1342
        %v1344 = vpop.f32.mrf.mxu0
        %v1345 = vadd.f32 %v1316, %v1344
        %1346 = vmatmul.bf16.gmra.mxu0 %v592
        %v1347 = vpop.f32.mrf.mxu0
        %v1348 = vadd.f32 %v1319, %v1347
        %v1349 = vpop.f32.mrf.mxu0
        %v1350 = vadd.f32 %v1321, %v1349
        %1351 = vmatmul.bf16.gmra.mxu0 %v593
        %v1352 = vpop.f32.mrf.mxu0
        %v1353 = vadd.f32 %v1324, %v1352
        %v1354 = vpop.f32.mrf.mxu0
        %v1355 = vadd.f32 %v1326, %v1354
        %1356 = vmatmul.bf16.gmra.mxu0 %v594
        %v1357 = vpop.f32.mrf.mxu0
        %v1358 = vadd.f32 %v1329, %v1357
        %v1359 = vpop.f32.mrf.mxu0
        %v1360 = vadd.f32 %v1331, %v1359
        %1361 = vdwg.mxu0
        %1362 = vmatpush.bf16.msra.mxu0 %v1099
        %1363 = vmatpush.bf16.msra.mxu0 %v1098
        %1364 = vmatpush.bf16.msra.mxu0 %v1097
        %1365 = vmatpush.bf16.msra.mxu0 %v1096
        %1366 = vmatpush.bf16.msra.mxu0 %v1095
        %1367 = vmatpush.bf16.msra.mxu0 %v1094
        %1368 = vmatpush.bf16.msra.mxu0 %v1093
        %1369 = vmatpush.bf16.msra.mxu0 %v1092
        %1370 = vmatmul.bf16.gmra.mxu0 %v533
        %v1371 = vpop.f32.mrf.mxu0
        %v1372 = vadd.f32 %v1343, %v1371
        %v1373 = vpop.f32.mrf.mxu0
        %v1374 = vadd.f32 %v1345, %v1373
        %1375 = vmatmul.bf16.gmra.mxu0 %v534
        %v1376 = vpop.f32.mrf.mxu0
        %v1377 = vadd.f32 %v1348, %v1376
        %v1378 = vpop.f32.mrf.mxu0
        %v1379 = vadd.f32 %v1350, %v1378
        %1380 = vmatmul.bf16.gmra.mxu0 %v535
        %v1381 = vpop.f32.mrf.mxu0
        %v1382 = vadd.f32 %v1353, %v1381
        %v1383 = vpop.f32.mrf.mxu0
        %v1384 = vadd.f32 %v1355, %v1383
        %1385 = vmatmul.bf16.gmra.mxu0 %v600
        %v1386 = vpop.f32.mrf.mxu0
        %v1387 = vadd.f32 %v1358, %v1386
        %v1388 = vpop.f32.mrf.mxu0
        %v1389 = vadd.f32 %v1360, %v1388
        %1390 = vdwg.mxu0
        %1391 = vmatpush.bf16.msra.mxu0 %v1107
        %1392 = vmatpush.bf16.msra.mxu0 %v1106
        %1393 = vmatpush.bf16.msra.mxu0 %v1105
        %1394 = vmatpush.bf16.msra.mxu0 %v1104
        %1395 = vmatpush.bf16.msra.mxu0 %v1103
        %1396 = vmatpush.bf16.msra.mxu0 %v1102
        %1397 = vmatpush.bf16.msra.mxu0 %v1101
        %1398 = vmatpush.bf16.msra.mxu0 %v1100
        %1399 = vmatmul.bf16.gmra.mxu0 %v549
        %v1400 = vpop.f32.mrf.mxu0
        %v1401 = vadd.f32 %v1372, %v1400
        %v1402 = vpop.f32.mrf.mxu0
        %v1403 = vadd.f32 %v1374, %v1402
        %1404 = vmatmul.bf16.gmra.mxu0 %v550
        %v1405 = vpop.f32.mrf.mxu0
        %v1406 = vadd.f32 %v1377, %v1405
        %v1407 = vpop.f32.mrf.mxu0
        %v1408 = vadd.f32 %v1379, %v1407
        %1409 = vmatmul.bf16.gmra.mxu0 %v551
        %v1410 = vpop.f32.mrf.mxu0
        %v1411 = vadd.f32 %v1382, %v1410
        %v1412 = vpop.f32.mrf.mxu0
        %v1413 = vadd.f32 %v1384, %v1412
        %1414 = vmatmul.bf16.gmra.mxu0 %v603
        %v1415 = vpop.f32.mrf.mxu0
        %v1416 = vadd.f32 %v1387, %v1415
        %v1417 = vpop.f32.mrf.mxu0
        %v1418 = vadd.f32 %v1389, %v1417
        %1419 = vdwg.mxu0
        %1420 = vmatpush.bf16.msra.mxu0 %v1115
        %1421 = vmatpush.bf16.msra.mxu0 %v1114
        %1422 = vmatpush.bf16.msra.mxu0 %v1113
        %1423 = vmatpush.bf16.msra.mxu0 %v1112
        %1424 = vmatpush.bf16.msra.mxu0 %v1111
        %1425 = vmatpush.bf16.msra.mxu0 %v1110
        %1426 = vmatpush.bf16.msra.mxu0 %v1109
        %1427 = vmatpush.bf16.msra.mxu0 %v1108
        %1428 = vmatmul.bf16.gmra.mxu0 %v565
        %v1429 = vpop.f32.mrf.mxu0
        %v1430 = vadd.f32 %v1401, %v1429
        %v1431 = vpop.f32.mrf.mxu0
        %v1432 = vadd.f32 %v1403, %v1431
        %1433 = vmatmul.bf16.gmra.mxu0 %v566
        %v1434 = vpop.f32.mrf.mxu0
        %v1435 = vadd.f32 %v1406, %v1434
        %v1436 = vpop.f32.mrf.mxu0
        %v1437 = vadd.f32 %v1408, %v1436
        %1438 = vmatmul.bf16.gmra.mxu0 %v567
        %v1439 = vpop.f32.mrf.mxu0
        %v1440 = vadd.f32 %v1411, %v1439
        %v1441 = vpop.f32.mrf.mxu0
        %v1442 = vadd.f32 %v1413, %v1441
        %1443 = vmatmul.bf16.gmra.mxu0 %v606
        %v1444 = vpop.f32.mrf.mxu0
        %v1445 = vadd.f32 %v1416, %v1444
        %v1446 = vpop.f32.mrf.mxu0
        %v1447 = vadd.f32 %v1418, %v1446
        %1448 = vdwg.mxu0
        %1449 = vst [vmem:[#allocation2] sm:$0xf] 0
        %1450 = vst [vmem:[#allocation2 + $0x4] sm:$0x1] 0
        %s1451 = scalar_lea.vmem [#allocation2], 72
        %1452 = vst [vmem:[%s1451] sm:$0xf] 0
        %1453 = vst [vmem:[%s1451 + $0x4] sm:$0x1] 0
        %vm1454 = vcmask 1040384
        %vm1455 = vsmask.f32 256
        %vm1456 = vmand %vm1454, %vm1455
        %v1457 = vld [vmem:[#allocation2] sm:$0x1]
        %v1458 = vsel %vm1456, 0, %v1457
        %1459 = vst [vmem:[#allocation2] sm:$0x1] %v1458
        %v1460 = vld [vmem:[#allocation2 + $0x8] sm:$0x1]
        %v1461 = vsel %vm1456, 0, %v1460
        %1462 = vst [vmem:[#allocation2 + $0x8] sm:$0x1] %v1461
        %v1463 = vld [vmem:[#allocation2 + $0x10] sm:$0x1]
        %v1464 = vsel %vm1456, 0, %v1463
        %1465 = vst [vmem:[#allocation2 + $0x10] sm:$0x1] %v1464
        %v1466 = vld [vmem:[#allocation2 + $0x18] sm:$0x1]
        %v1467 = vsel %vm1456, 0, %v1466
        %1468 = vst [vmem:[#allocation2 + $0x18] sm:$0x1] %v1467
        %v1469 = vld [vmem:[#allocation2 + $0x20] sm:$0x1]
        %v1470 = vsel %vm1456, 0, %v1469
        %1471 = vst [vmem:[#allocation2 + $0x20] sm:$0x1] %v1470
        %v1472 = vld [vmem:[#allocation2 + $0x28] sm:$0x1]
        %v1473 = vsel %vm1456, 0, %v1472
        %1474 = vst [vmem:[#allocation2 + $0x28] sm:$0x1] %v1473
        %v1475 = vld [vmem:[#allocation2 + $0x30] sm:$0x1]
        %v1476 = vsel %vm1456, 0, %v1475
        %1477 = vst [vmem:[#allocation2 + $0x30] sm:$0x1] %v1476
        %v1478 = vld [vmem:[#allocation2 + $0x38] sm:$0x1]
        %v1479 = vsel %vm1456, 0, %v1478
        %1480 = vst [vmem:[#allocation2 + $0x38] sm:$0x1] %v1479
        %v1481 = vld [vmem:[#allocation2 + $0x40] sm:$0x1]
        %v1482 = vsel %vm1456, 0, %v1481
        %1483 = vst [vmem:[#allocation2 + $0x40] sm:$0x1] %v1482
        %v1484 = vld [vmem:[#allocation2 + $0x48] sm:$0x1]
        %v1485 = vsel %vm1456, 0, %v1484
        %1486 = vst [vmem:[#allocation2 + $0x48] sm:$0x1] %v1485
        %vm1487 = vsmask.f32 7938
        %vm1488 = vmand %vm1454, %vm1487
        %v1489 = vld [vmem:[#allocation2 + $0x4] sm:$0x1]
        %v1490 = vsel %vm1488, 0, %v1489
        %1491 = vst [vmem:[#allocation2 + $0x4] sm:$0x1] %v1490
        %v1492 = vld [vmem:[#allocation2 + $0xc] sm:$0x1]
        %v1493 = vsel %vm1488, 0, %v1492
        %1494 = vst [vmem:[#allocation2 + $0xc] sm:$0x1] %v1493
        %v1495 = vld [vmem:[#allocation2 + $0x14] sm:$0x1]
        %v1496 = vsel %vm1488, 0, %v1495
        %1497 = vst [vmem:[#allocation2 + $0x14] sm:$0x1] %v1496
        %v1498 = vld [vmem:[#allocation2 + $0x1c] sm:$0x1]
        %v1499 = vsel %vm1488, 0, %v1498
        %1500 = vst [vmem:[#allocation2 + $0x1c] sm:$0x1] %v1499
        %v1501 = vld [vmem:[#allocation2 + $0x24] sm:$0x1]
        %v1502 = vsel %vm1488, 0, %v1501
        %1503 = vst [vmem:[#allocation2 + $0x24] sm:$0x1] %v1502
        %v1504 = vld [vmem:[#allocation2 + $0x2c] sm:$0x1]
        %v1505 = vsel %vm1488, 0, %v1504
        %1506 = vst [vmem:[#allocation2 + $0x2c] sm:$0x1] %v1505
        %v1507 = vld [vmem:[#allocation2 + $0x34] sm:$0x1]
        %v1508 = vsel %vm1488, 0, %v1507
        %1509 = vst [vmem:[#allocation2 + $0x34] sm:$0x1] %v1508
        %v1510 = vld [vmem:[#allocation2 + $0x3c] sm:$0x1]
        %v1511 = vsel %vm1488, 0, %v1510
        %1512 = vst [vmem:[#allocation2 + $0x3c] sm:$0x1] %v1511
        %v1513 = vld [vmem:[#allocation2 + $0x44] sm:$0x1]
        %v1514 = vsel %vm1488, 0, %v1513
        %1515 = vst [vmem:[#allocation2 + $0x44] sm:$0x1] %v1514
        %v1516 = vld [vmem:[#allocation2 + $0x4c] sm:$0x1]
        %v1517 = vsel %vm1488, 0, %v1516
        %1518 = vst [vmem:[#allocation2 + $0x4c] sm:$0x1] %v1517
        %v1519 = vpack.c.bf16 %v1430, %v1430
        %v1520 = vpack.c.bf16 %v1432, %v1432
        %v1521 = vpack.c.bf16 %v1435, %v1435
        %v1522 = vpack.c.bf16 %v1437, %v1437
        %v1523 = vpack.c.bf16 %v1440, %v1440
        %v1524 = vpack.c.bf16 %v1442, %v1442
        %v1525 = vpack.c.bf16 %v1445, %v1445
        %v1526 = vpack.c.bf16 %v1447, %v1447
        %v1528 = vshrl.u32 %v1519, 16
        %v1530 = vrot.slane %v1528, 7
        %v1531 = vshll.u32 %v1519, 16
        %v1533 = vor.u32 %v1530, %v1531
        %v1534 = vrot.slane %v1530, 4
        %v1536 = vshrl.u32 %v1520, 16
        %v1538 = vrot.slane %v1536, 7
        %v1539 = vshll.u32 %v1520, 16
        %v1541 = vor.u32 %v1538, %v1539
        %v1542 = vrot.slane %v1538, 4
        %v1544 = vshrl.u32 %v1521, 16
        %v1546 = vrot.slane %v1544, 7
        %v1547 = vshll.u32 %v1521, 16
        %v1549 = vor.u32 %v1546, %v1547
        %v1550 = vrot.slane %v1546, 4
        %v1552 = vshrl.u32 %v1522, 16
        %v1554 = vrot.slane %v1552, 7
        %v1555 = vshll.u32 %v1522, 16
        %v1557 = vor.u32 %v1554, %v1555
        %v1558 = vrot.slane %v1554, 4
        %v1560 = vshrl.u32 %v1523, 16
        %v1562 = vrot.slane %v1560, 7
        %v1563 = vshll.u32 %v1523, 16
        %v1565 = vor.u32 %v1562, %v1563
        %v1566 = vrot.slane %v1562, 4
        %v1568 = vshrl.u32 %v1524, 16
        %v1570 = vrot.slane %v1568, 7
        %v1571 = vshll.u32 %v1524, 16
        %v1573 = vor.u32 %v1570, %v1571
        %v1574 = vrot.slane %v1570, 4
        %v1576 = vshrl.u32 %v1525, 16
        %v1578 = vrot.slane %v1576, 7
        %v1579 = vshll.u32 %v1525, 16
        %v1581 = vor.u32 %v1578, %v1579
        %v1582 = vrot.slane %v1578, 4
        %v1584 = vshrl.u32 %v1526, 16
        %v1586 = vrot.slane %v1584, 7
        %v1587 = vshll.u32 %v1526, 16
        %v1589 = vor.u32 %v1586, %v1587
        %v1590 = vrot.slane %v1586, 4
        %s1607 = scalar_lea.vmem [#allocation2], 8
        %vm1608 = vcmask 1043456
        %vm1609 = vmand %vm1608, %vm1487
        %v1610 = vld [vmem:[%s1607] sm:$0xf]
        %v1611 = vsel %vm1609, %v1533, %v1610
        %1612 = vst [vmem:[%s1607] sm:$0xf] %v1611
        %v1613 = vld [vmem:[%s1607 + $0x4] sm:$0x1]
        %v1614 = vsel %vm1456, %v1534, %v1613
        %1615 = vst [vmem:[%s1607 + $0x4] sm:$0x1] %v1614
        %v1616 = vld [vmem:[%s1607 + $0x8] sm:$0xf]
        %v1617 = vsel %vm1609, %v1541, %v1616
        %1618 = vst [vmem:[%s1607 + $0x8] sm:$0xf] %v1617
        %v1619 = vld [vmem:[%s1607 + $0xc] sm:$0x1]
        %v1620 = vsel %vm1456, %v1542, %v1619
        %1621 = vst [vmem:[%s1607 + $0xc] sm:$0x1] %v1620
        %v1622 = vld [vmem:[%s1607 + $0x10] sm:$0xf]
        %v1623 = vsel %vm1609, %v1549, %v1622
        %1624 = vst [vmem:[%s1607 + $0x10] sm:$0xf] %v1623
        %v1625 = vld [vmem:[%s1607 + $0x14] sm:$0x1]
        %v1626 = vsel %vm1456, %v1550, %v1625
        %1627 = vst [vmem:[%s1607 + $0x14] sm:$0x1] %v1626
        %v1628 = vld [vmem:[%s1607 + $0x18] sm:$0xf]
        %v1629 = vsel %vm1609, %v1557, %v1628
        %1630 = vst [vmem:[%s1607 + $0x18] sm:$0xf] %v1629
        %v1631 = vld [vmem:[%s1607 + $0x1c] sm:$0x1]
        %v1632 = vsel %vm1456, %v1558, %v1631
        %1633 = vst [vmem:[%s1607 + $0x1c] sm:$0x1] %v1632
        %v1634 = vld [vmem:[%s1607 + $0x20] sm:$0xf]
        %v1635 = vsel %vm1609, %v1565, %v1634
        %1636 = vst [vmem:[%s1607 + $0x20] sm:$0xf] %v1635
        %v1637 = vld [vmem:[%s1607 + $0x24] sm:$0x1]
        %v1638 = vsel %vm1456, %v1566, %v1637
        %1639 = vst [vmem:[%s1607 + $0x24] sm:$0x1] %v1638
        %v1640 = vld [vmem:[%s1607 + $0x28] sm:$0xf]
        %v1641 = vsel %vm1609, %v1573, %v1640
        %1642 = vst [vmem:[%s1607 + $0x28] sm:$0xf] %v1641
        %v1643 = vld [vmem:[%s1607 + $0x2c] sm:$0x1]
        %v1644 = vsel %vm1456, %v1574, %v1643
        %1645 = vst [vmem:[%s1607 + $0x2c] sm:$0x1] %v1644
        %v1646 = vld [vmem:[%s1607 + $0x30] sm:$0xf]
        %v1647 = vsel %vm1609, %v1581, %v1646
        %1648 = vst [vmem:[%s1607 + $0x30] sm:$0xf] %v1647
        %v1649 = vld [vmem:[%s1607 + $0x34] sm:$0x1]
        %v1650 = vsel %vm1456, %v1582, %v1649
        %1651 = vst [vmem:[%s1607 + $0x34] sm:$0x1] %v1650
        %v1652 = vld [vmem:[%s1607 + $0x38] sm:$0xf]
        %v1653 = vsel %vm1609, %v1589, %v1652
        %1654 = vst [vmem:[%s1607 + $0x38] sm:$0xf] %v1653
        %v1655 = vld [vmem:[%s1607 + $0x3c] sm:$0x1]
        %v1656 = vsel %vm1456, %v1590, %v1655
        %1657 = vst [vmem:[%s1607 + $0x3c] sm:$0x1] %v1656
        %v1658 = vld [vmem:[#allocation2] sm:$0xf]
        %v1659 = vld [vmem:[#allocation2 + $0x4] sm:$0x1]
        %v1660 = vld [vmem:[#allocation2 + $0x8] sm:$0xf]
        %v1661 = vld [vmem:[#allocation2 + $0xc] sm:$0x1]
        %v1662 = vld [vmem:[#allocation2 + $0x10] sm:$0xf]
        %v1663 = vld [vmem:[#allocation2 + $0x14] sm:$0x1]
        %v1664 = vld [vmem:[#allocation2 + $0x18] sm:$0xf]
        %v1665 = vld [vmem:[#allocation2 + $0x1c] sm:$0x1]
        %v1666 = vld [vmem:[#allocation2 + $0x20] sm:$0xf]
        %v1667 = vld [vmem:[#allocation2 + $0x24] sm:$0x1]
        %v1668 = vld [vmem:[#allocation2 + $0x28] sm:$0xf]
        %v1669 = vld [vmem:[#allocation2 + $0x2c] sm:$0x1]
        %v1670 = vld [vmem:[#allocation2 + $0x30] sm:$0xf]
        %v1671 = vld [vmem:[#allocation2 + $0x34] sm:$0x1]
        %v1672 = vld [vmem:[#allocation2 + $0x38] sm:$0xf]
        %v1673 = vld [vmem:[#allocation2 + $0x3c] sm:$0x1]
        %v1674 = vld [vmem:[#allocation2 + $0x40] sm:$0xf]
        %v1675 = vld [vmem:[#allocation2 + $0x44] sm:$0x1]
        %v1676 = vld [vmem:[#allocation2 + $0x48] sm:$0xf]
        %v1677 = vld [vmem:[#allocation2 + $0x4c] sm:$0x1]
        %v1679 = vshrl.u32 %v1658, 16
        %v1681 = vrot.slane %v1679, 4
        %v1682 = vshll.u32 %v1658, 16
        %v1684 = vrot.slane %v1682, 5
        %v1685 = vor.u32 %v1681, %v1684
        %v1686 = vrot.slane %v1685, 4
        %v1688 = vshll.u32 %v1659, 16
        %v1690 = vrot.slane %v1688, 5
        %v1691 = vsel %vm320, %v1686, %v1690
        %v1693 = vshrl.u32 %v1660, 16
        %v1695 = vrot.slane %v1693, 4
        %v1696 = vshll.u32 %v1660, 16
        %v1698 = vrot.slane %v1696, 5
        %v1699 = vor.u32 %v1695, %v1698
        %v1700 = vrot.slane %v1699, 4
        %v1702 = vshll.u32 %v1661, 16
        %v1704 = vrot.slane %v1702, 5
        %v1705 = vsel %vm320, %v1700, %v1704
        %v1707 = vshrl.u32 %v1662, 16
        %v1709 = vrot.slane %v1707, 4
        %v1710 = vshll.u32 %v1662, 16
        %v1712 = vrot.slane %v1710, 5
        %v1713 = vor.u32 %v1709, %v1712
        %v1714 = vrot.slane %v1713, 4
        %v1716 = vshll.u32 %v1663, 16
        %v1718 = vrot.slane %v1716, 5
        %v1719 = vsel %vm320, %v1714, %v1718
        %v1721 = vshrl.u32 %v1664, 16
        %v1723 = vrot.slane %v1721, 4
        %v1724 = vshll.u32 %v1664, 16
        %v1726 = vrot.slane %v1724, 5
        %v1727 = vor.u32 %v1723, %v1726
        %v1728 = vrot.slane %v1727, 4
        %v1730 = vshll.u32 %v1665, 16
        %v1732 = vrot.slane %v1730, 5
        %v1733 = vsel %vm320, %v1728, %v1732
        %v1735 = vshrl.u32 %v1666, 16
        %v1737 = vrot.slane %v1735, 4
        %v1738 = vshll.u32 %v1666, 16
        %v1740 = vrot.slane %v1738, 5
        %v1741 = vor.u32 %v1737, %v1740
        %v1742 = vrot.slane %v1741, 4
        %v1744 = vshll.u32 %v1667, 16
        %v1746 = vrot.slane %v1744, 5
        %v1747 = vsel %vm320, %v1742, %v1746
        %v1749 = vshrl.u32 %v1668, 16
        %v1751 = vrot.slane %v1749, 4
        %v1752 = vshll.u32 %v1668, 16
        %v1754 = vrot.slane %v1752, 5
        %v1755 = vor.u32 %v1751, %v1754
        %v1756 = vrot.slane %v1755, 4
        %v1758 = vshll.u32 %v1669, 16
        %v1760 = vrot.slane %v1758, 5
        %v1761 = vsel %vm320, %v1756, %v1760
        %v1763 = vshrl.u32 %v1670, 16
        %v1765 = vrot.slane %v1763, 4
        %v1766 = vshll.u32 %v1670, 16
        %v1768 = vrot.slane %v1766, 5
        %v1769 = vor.u32 %v1765, %v1768
        %v1770 = vrot.slane %v1769, 4
        %v1772 = vshll.u32 %v1671, 16
        %v1774 = vrot.slane %v1772, 5
        %v1775 = vsel %vm320, %v1770, %v1774
        %v1777 = vshrl.u32 %v1672, 16
        %v1779 = vrot.slane %v1777, 4
        %v1780 = vshll.u32 %v1672, 16
        %v1782 = vrot.slane %v1780, 5
        %v1783 = vor.u32 %v1779, %v1782
        %v1784 = vrot.slane %v1783, 4
        %v1786 = vshll.u32 %v1673, 16
        %v1788 = vrot.slane %v1786, 5
        %v1789 = vsel %vm320, %v1784, %v1788
        %v1806 = vrot.slane %v1658, 5
        %v1807 = vrot.slane %v1806, 4
        %v1808 = vrot.slane %v1659, 5
        %v1809 = vsel %vm451, %v1807, %v1808
        %v1810 = vrot.slane %v1660, 5
        %v1811 = vrot.slane %v1810, 4
        %v1812 = vrot.slane %v1661, 5
        %v1813 = vsel %vm451, %v1811, %v1812
        %v1814 = vrot.slane %v1662, 5
        %v1815 = vrot.slane %v1814, 4
        %v1816 = vrot.slane %v1663, 5
        %v1817 = vsel %vm451, %v1815, %v1816
        %v1818 = vrot.slane %v1664, 5
        %v1819 = vrot.slane %v1818, 4
        %v1820 = vrot.slane %v1665, 5
        %v1821 = vsel %vm451, %v1819, %v1820
        %v1822 = vrot.slane %v1666, 5
        %v1823 = vrot.slane %v1822, 4
        %v1824 = vrot.slane %v1667, 5
        %v1825 = vsel %vm451, %v1823, %v1824
        %v1826 = vrot.slane %v1668, 5
        %v1827 = vrot.slane %v1826, 4
        %v1828 = vrot.slane %v1669, 5
        %v1829 = vsel %vm451, %v1827, %v1828
        %v1830 = vrot.slane %v1670, 5
        %v1831 = vrot.slane %v1830, 4
        %v1832 = vrot.slane %v1671, 5
        %v1833 = vsel %vm451, %v1831, %v1832
        %v1834 = vrot.slane %v1672, 5
        %v1835 = vrot.slane %v1834, 4
        %v1836 = vrot.slane %v1673, 5
        %v1837 = vsel %vm451, %v1835, %v1836
        %v1839 = vshrl.u32 %v1674, 16
        %v1841 = vrot.slane %v1839, 4
        %v1842 = vshll.u32 %v1674, 16
        %v1844 = vrot.slane %v1842, 5
        %v1845 = vor.u32 %v1841, %v1844
        %v1846 = vrot.slane %v1845, 4
        %v1848 = vshll.u32 %v1675, 16
        %v1850 = vrot.slane %v1848, 5
        %v1851 = vsel %vm320, %v1846, %v1850
        %v1854 = vrot.slane %v1674, 5
        %v1855 = vrot.slane %v1854, 4
        %v1856 = vrot.slane %v1675, 5
        %v1857 = vsel %vm451, %v1855, %v1856
        %v1859 = vshrl.u32 %v1676, 16
        %v1861 = vrot.slane %v1859, 4
        %v1862 = vshll.u32 %v1676, 16
        %v1864 = vrot.slane %v1862, 5
        %v1865 = vor.u32 %v1861, %v1864
        %v1866 = vrot.slane %v1865, 4
        %v1868 = vshll.u32 %v1677, 16
        %v1870 = vrot.slane %v1868, 5
        %v1871 = vsel %vm320, %v1866, %v1870
        %v1874 = vrot.slane %v1676, 5
        %v1875 = vrot.slane %v1874, 4
        %v1876 = vrot.slane %v1677, 5
        %v1877 = vsel %vm451, %v1875, %v1876
        %v1878 = vunpack.c.l.b16 %v1658
        %v1879 = vunpack.c.l.b16 %v1660
        %v1880 = vunpack.c.l.b16 %v1662
        %v1881 = vunpack.c.l.b16 %v1664
        %v1882 = vunpack.c.l.b16 %v1666
        %v1883 = vunpack.c.l.b16 %v1668
        %v1884 = vunpack.c.l.b16 %v1670
        %v1885 = vunpack.c.l.b16 %v1672
        %v1886 = vpack.c.b16 %v1879, %v1878
        %v1887 = vpack.c.b16 %v1881, %v1880
        %v1888 = vpack.c.b16 %v1883, %v1882
        %v1889 = vpack.c.b16 %v1885, %v1884
        %v1894 = vunpack.c.l.b16 %v1691
        %v1895 = vunpack.c.l.b16 %v1705
        %v1896 = vunpack.c.l.b16 %v1719
        %v1897 = vunpack.c.l.b16 %v1733
        %v1898 = vunpack.c.l.b16 %v1747
        %v1899 = vunpack.c.l.b16 %v1761
        %v1900 = vunpack.c.l.b16 %v1775
        %v1901 = vunpack.c.l.b16 %v1789
        %v1902 = vpack.c.b16 %v1895, %v1894
        %v1903 = vpack.c.b16 %v1897, %v1896
        %v1904 = vpack.c.b16 %v1899, %v1898
        %v1905 = vpack.c.b16 %v1901, %v1900
        %v1910 = vunpack.c.l.b16 %v1809
        %v1911 = vunpack.c.l.b16 %v1813
        %v1912 = vunpack.c.l.b16 %v1817
        %v1913 = vunpack.c.l.b16 %v1821
        %v1914 = vunpack.c.l.b16 %v1825
        %v1915 = vunpack.c.l.b16 %v1829
        %v1916 = vunpack.c.l.b16 %v1833
        %v1917 = vunpack.c.l.b16 %v1837
        %v1918 = vpack.c.b16 %v1911, %v1910
        %v1919 = vpack.c.b16 %v1913, %v1912
        %v1920 = vpack.c.b16 %v1915, %v1914
        %v1921 = vpack.c.b16 %v1917, %v1916
        %v1926 = vunpack.c.l.b16 %v1674
        %v1927 = vpack.c.b16 %v1880, %v1879
        %v1928 = vpack.c.b16 %v1882, %v1881
        %v1929 = vpack.c.b16 %v1884, %v1883
        %v1930 = vpack.c.b16 %v1926, %v1885
        %v1935 = vunpack.c.l.b16 %v1851
        %v1936 = vpack.c.b16 %v1896, %v1895
        %v1937 = vpack.c.b16 %v1898, %v1897
        %v1938 = vpack.c.b16 %v1900, %v1899
        %v1939 = vpack.c.b16 %v1935, %v1901
        %v1944 = vunpack.c.l.b16 %v1857
        %v1945 = vpack.c.b16 %v1912, %v1911
        %v1946 = vpack.c.b16 %v1914, %v1913
        %v1947 = vpack.c.b16 %v1916, %v1915
        %v1948 = vpack.c.b16 %v1944, %v1917
        %v1953 = vunpack.c.l.b16 %v1676
        %v1954 = vpack.c.b16 %v1953, %v1926
        %v1956 = vunpack.c.l.b16 %v1871
        %v1957 = vpack.c.b16 %v1956, %v1935
        %v1959 = vunpack.c.l.b16 %v1877
        %v1960 = vpack.c.b16 %v1959, %v1944
        %v1962 = vld [vmem:[#allocation6] sm:$0xf]
        %v1963 = vld [vmem:[#allocation6 + $0x4] sm:$0xf]
        %v1964 = vld [vmem:[#allocation6 + $0x8] sm:$0xf]
        %v1965 = vld [vmem:[#allocation6 + $0xc] sm:$0xf]
        %v1966 = vld [vmem:[#allocation6 + $0x10] sm:$0xf]
        %v1967 = vld [vmem:[#allocation6 + $0x14] sm:$0xf]
        %v1968 = vld [vmem:[#allocation6 + $0x18] sm:$0xf]
        %v1969 = vld [vmem:[#allocation6 + $0x1c] sm:$0xf]
        %v1970 = vld [vmem:[#allocation6 + $0x20] sm:$0xf]
        %v1971 = vld [vmem:[#allocation6 + $0x24] sm:$0xf]
        %v1972 = vld [vmem:[#allocation6 + $0x28] sm:$0xf]
        %v1973 = vld [vmem:[#allocation6 + $0x2c] sm:$0xf]
        %v1974 = vld [vmem:[#allocation6 + $0x30] sm:$0xf]
        %v1975 = vld [vmem:[#allocation6 + $0x34] sm:$0xf]
        %v1976 = vld [vmem:[#allocation6 + $0x38] sm:$0xf]
        %v1977 = vld [vmem:[#allocation6 + $0x3c] sm:$0xf]
        %v1978 = vld [vmem:[#allocation6 + $0x40] sm:$0xf]
        %v1979 = vld [vmem:[#allocation6 + $0x44] sm:$0xf]
        %v1980 = vld [vmem:[#allocation6 + $0x48] sm:$0xf]
        %v1981 = vld [vmem:[#allocation6 + $0x4c] sm:$0xf]
        %v1982 = vld [vmem:[#allocation6 + $0x50] sm:$0xf]
        %v1983 = vld [vmem:[#allocation6 + $0x54] sm:$0xf]
        %v1984 = vld [vmem:[#allocation6 + $0x58] sm:$0xf]
        %v1985 = vld [vmem:[#allocation6 + $0x5c] sm:$0xf]
        %v1986 = vld [vmem:[#allocation6 + $0x60] sm:$0xf]
        %v1987 = vld [vmem:[#allocation6 + $0x64] sm:$0xf]
        %v1988 = vld [vmem:[#allocation6 + $0x68] sm:$0xf]
        %v1989 = vld [vmem:[#allocation6 + $0x6c] sm:$0xf]
        %v1990 = vld [vmem:[#allocation6 + $0x70] sm:$0xf]
        %v1991 = vld [vmem:[#allocation6 + $0x74] sm:$0xf]
        %v1992 = vld [vmem:[#allocation6 + $0x78] sm:$0xf]
        %v1993 = vld [vmem:[#allocation6 + $0x7c] sm:$0xf]
        %v1994 = vld [vmem:[#allocation6 + $0x80] sm:$0xf]
        %v1995 = vld [vmem:[#allocation6 + $0x84] sm:$0xf]
        %v1996 = vld [vmem:[#allocation6 + $0x88] sm:$0xf]
        %v1997 = vld [vmem:[#allocation6 + $0x8c] sm:$0xf]
        %v1998 = vld [vmem:[#allocation6 + $0x90] sm:$0xf]
        %v1999 = vld [vmem:[#allocation6 + $0x94] sm:$0xf]
        %v2000 = vld [vmem:[#allocation6 + $0x98] sm:$0xf]
        %v2001 = vld [vmem:[#allocation6 + $0x9c] sm:$0xf]
        %v2002 = vld [vmem:[#allocation6 + $0xa0] sm:$0xf]
        %v2003 = vld [vmem:[#allocation6 + $0xa4] sm:$0xf]
        %v2004 = vld [vmem:[#allocation6 + $0xa8] sm:$0xf]
        %v2005 = vld [vmem:[#allocation6 + $0xac] sm:$0xf]
        %v2006 = vld [vmem:[#allocation6 + $0xb0] sm:$0xf]
        %v2007 = vld [vmem:[#allocation6 + $0xb4] sm:$0xf]
        %v2008 = vld [vmem:[#allocation6 + $0xb8] sm:$0xf]
        %v2009 = vld [vmem:[#allocation6 + $0xbc] sm:$0xf]
        %v2010 = vld [vmem:[#allocation6 + $0xc0] sm:$0xf]
        %v2011 = vld [vmem:[#allocation6 + $0xc4] sm:$0xf]
        %v2012 = vld [vmem:[#allocation6 + $0xc8] sm:$0xf]
        %v2013 = vld [vmem:[#allocation6 + $0xcc] sm:$0xf]
        %v2014 = vld [vmem:[#allocation6 + $0xd0] sm:$0xf]
        %v2015 = vld [vmem:[#allocation6 + $0xd4] sm:$0xf]
        %v2016 = vld [vmem:[#allocation6 + $0xd8] sm:$0xf]
        %v2017 = vld [vmem:[#allocation6 + $0xdc] sm:$0xf]
        %v2018 = vld [vmem:[#allocation6 + $0xe0] sm:$0xf]
        %v2019 = vld [vmem:[#allocation6 + $0xe4] sm:$0xf]
        %v2020 = vld [vmem:[#allocation6 + $0xe8] sm:$0xf]
        %v2021 = vld [vmem:[#allocation6 + $0xec] sm:$0xf]
        %v2022 = vld [vmem:[#allocation6 + $0xf0] sm:$0xf]
        %v2023 = vld [vmem:[#allocation6 + $0xf4] sm:$0xf]
        %v2024 = vld [vmem:[#allocation6 + $0xf8] sm:$0xf]
        %v2025 = vld [vmem:[#allocation6 + $0xfc] sm:$0xf]
        %v2026 = vld [vmem:[#allocation6 + $0x100] sm:$0xf]
        %v2027 = vld [vmem:[#allocation6 + $0x104] sm:$0xf]
        %v2028 = vld [vmem:[#allocation6 + $0x108] sm:$0xf]
        %v2029 = vld [vmem:[#allocation6 + $0x10c] sm:$0xf]
        %v2030 = vld [vmem:[#allocation6 + $0x110] sm:$0xf]
        %v2031 = vld [vmem:[#allocation6 + $0x114] sm:$0xf]
        %v2032 = vld [vmem:[#allocation6 + $0x118] sm:$0xf]
        %v2033 = vld [vmem:[#allocation6 + $0x11c] sm:$0xf]
        %v2034 = vld [vmem:[#allocation6 + $0x120] sm:$0xf]
        %v2035 = vld [vmem:[#allocation6 + $0x124] sm:$0xf]
        %v2036 = vld [vmem:[#allocation6 + $0x128] sm:$0xf]
        %v2037 = vld [vmem:[#allocation6 + $0x12c] sm:$0xf]
        %v2038 = vld [vmem:[#allocation6 + $0x130] sm:$0xf]
        %v2039 = vld [vmem:[#allocation6 + $0x134] sm:$0xf]
        %v2040 = vld [vmem:[#allocation6 + $0x138] sm:$0xf]
        %v2041 = vld [vmem:[#allocation6 + $0x13c] sm:$0xf]
        %v2042 = vld [vmem:[#allocation6 + $0x140] sm:$0xf]
        %v2043 = vld [vmem:[#allocation6 + $0x144] sm:$0xf]
        %v2044 = vld [vmem:[#allocation6 + $0x148] sm:$0xf]
        %v2045 = vld [vmem:[#allocation6 + $0x14c] sm:$0xf]
        %v2046 = vld [vmem:[#allocation6 + $0x150] sm:$0xf]
        %v2047 = vld [vmem:[#allocation6 + $0x154] sm:$0xf]
        %v2048 = vld [vmem:[#allocation6 + $0x158] sm:$0xf]
        %v2049 = vld [vmem:[#allocation6 + $0x15c] sm:$0xf]
        %v2050 = vld [vmem:[#allocation6 + $0x160] sm:$0xf]
        %v2051 = vld [vmem:[#allocation6 + $0x164] sm:$0xf]
        %v2052 = vld [vmem:[#allocation6 + $0x168] sm:$0xf]
        %v2053 = vld [vmem:[#allocation6 + $0x16c] sm:$0xf]
        %v2054 = vld [vmem:[#allocation6 + $0x170] sm:$0xf]
        %v2055 = vld [vmem:[#allocation6 + $0x174] sm:$0xf]
        %v2056 = vld [vmem:[#allocation6 + $0x178] sm:$0xf]
        %v2057 = vld [vmem:[#allocation6 + $0x17c] sm:$0xf]
        %v2058 = vld [vmem:[#allocation6 + $0x180] sm:$0xf]
        %v2059 = vld [vmem:[#allocation6 + $0x184] sm:$0xf]
        %v2060 = vld [vmem:[#allocation6 + $0x188] sm:$0xf]
        %v2061 = vld [vmem:[#allocation6 + $0x18c] sm:$0xf]
        %v2062 = vld [vmem:[#allocation6 + $0x190] sm:$0xf]
        %v2063 = vld [vmem:[#allocation6 + $0x194] sm:$0xf]
        %v2064 = vld [vmem:[#allocation6 + $0x198] sm:$0xf]
        %v2065 = vld [vmem:[#allocation6 + $0x19c] sm:$0xf]
        %v2066 = vld [vmem:[#allocation6 + $0x1a0] sm:$0xf]
        %v2067 = vld [vmem:[#allocation6 + $0x1a4] sm:$0xf]
        %v2068 = vld [vmem:[#allocation6 + $0x1a8] sm:$0xf]
        %v2069 = vld [vmem:[#allocation6 + $0x1ac] sm:$0xf]
        %v2070 = vld [vmem:[#allocation6 + $0x1b0] sm:$0xf]
        %v2071 = vld [vmem:[#allocation6 + $0x1b4] sm:$0xf]
        %v2072 = vld [vmem:[#allocation6 + $0x1b8] sm:$0xf]
        %v2073 = vld [vmem:[#allocation6 + $0x1bc] sm:$0xf]
        %v2074 = vld [vmem:[#allocation6 + $0x1c0] sm:$0xf]
        %v2075 = vld [vmem:[#allocation6 + $0x1c4] sm:$0xf]
        %v2076 = vld [vmem:[#allocation6 + $0x1c8] sm:$0xf]
        %v2077 = vld [vmem:[#allocation6 + $0x1cc] sm:$0xf]
        %v2078 = vld [vmem:[#allocation6 + $0x1d0] sm:$0xf]
        %v2079 = vld [vmem:[#allocation6 + $0x1d4] sm:$0xf]
        %v2080 = vld [vmem:[#allocation6 + $0x1d8] sm:$0xf]
        %v2081 = vld [vmem:[#allocation6 + $0x1dc] sm:$0xf]
        %v2082 = vld [vmem:[#allocation6 + $0x1e0] sm:$0xf]
        %v2083 = vld [vmem:[#allocation6 + $0x1e4] sm:$0xf]
        %v2084 = vld [vmem:[#allocation6 + $0x1e8] sm:$0xf]
        %v2085 = vld [vmem:[#allocation6 + $0x1ec] sm:$0xf]
        %v2086 = vld [vmem:[#allocation6 + $0x1f0] sm:$0xf]
        %v2087 = vld [vmem:[#allocation6 + $0x1f4] sm:$0xf]
        %v2088 = vld [vmem:[#allocation6 + $0x1f8] sm:$0xf]
        %v2089 = vld [vmem:[#allocation6 + $0x1fc] sm:$0xf]
        %v2090 = vld [vmem:[#allocation6 + $0x200] sm:$0xf]
        %v2091 = vld [vmem:[#allocation6 + $0x204] sm:$0xf]
        %v2092 = vld [vmem:[#allocation6 + $0x208] sm:$0xf]
        %v2093 = vld [vmem:[#allocation6 + $0x20c] sm:$0xf]
        %v2094 = vld [vmem:[#allocation6 + $0x210] sm:$0xf]
        %v2095 = vld [vmem:[#allocation6 + $0x214] sm:$0xf]
        %v2096 = vld [vmem:[#allocation6 + $0x218] sm:$0xf]
        %v2097 = vld [vmem:[#allocation6 + $0x21c] sm:$0xf]
        %v2098 = vld [vmem:[#allocation6 + $0x220] sm:$0xf]
        %v2099 = vld [vmem:[#allocation6 + $0x224] sm:$0xf]
        %v2100 = vld [vmem:[#allocation6 + $0x228] sm:$0xf]
        %v2101 = vld [vmem:[#allocation6 + $0x22c] sm:$0xf]
        %v2102 = vld [vmem:[#allocation6 + $0x230] sm:$0xf]
        %v2103 = vld [vmem:[#allocation6 + $0x234] sm:$0xf]
        %v2104 = vld [vmem:[#allocation6 + $0x238] sm:$0xf]
        %v2105 = vld [vmem:[#allocation6 + $0x23c] sm:$0xf]
        %v2106 = vld [vmem:[%s4] sm:$0x1]
        %v2108 = vperm.slane %v2106, 0
        %v2254 = vunpack.c.l.b16 %v1962
        %v2255 = vunpack.c.l.b16 %v1963
        %v2256 = vunpack.c.l.b16 %v1964
        %v2257 = vunpack.c.l.b16 %v1965
        %v2258 = vunpack.c.l.b16 %v1966
        %v2259 = vunpack.c.l.b16 %v1967
        %v2260 = vunpack.c.l.b16 %v1968
        %v2261 = vunpack.c.l.b16 %v1969
        %v2262 = vunpack.c.l.b16 %v1970
        %v2263 = vunpack.c.l.b16 %v1971
        %v2264 = vunpack.c.l.b16 %v1972
        %v2265 = vunpack.c.l.b16 %v1973
        %v2266 = vunpack.c.l.b16 %v1974
        %v2267 = vunpack.c.l.b16 %v1975
        %v2268 = vunpack.c.l.b16 %v1976
        %v2269 = vunpack.c.l.b16 %v1977
        %v2270 = vunpack.c.l.b16 %v1978
        %v2271 = vunpack.c.l.b16 %v1979
        %v2272 = vunpack.c.l.b16 %v1980
        %v2273 = vunpack.c.l.b16 %v1981
        %v2274 = vunpack.c.l.b16 %v1982
        %v2275 = vunpack.c.l.b16 %v1983
        %v2276 = vunpack.c.l.b16 %v1984
        %v2277 = vunpack.c.l.b16 %v1985
        %v2278 = vunpack.c.l.b16 %v1986
        %v2279 = vunpack.c.l.b16 %v1987
        %v2280 = vunpack.c.l.b16 %v1988
        %v2281 = vunpack.c.l.b16 %v1989
        %v2282 = vunpack.c.l.b16 %v1990
        %v2283 = vunpack.c.l.b16 %v1991
        %v2284 = vunpack.c.l.b16 %v1992
        %v2285 = vunpack.c.l.b16 %v1993
        %v2286 = vunpack.c.l.b16 %v1994
        %v2287 = vunpack.c.l.b16 %v1995
        %v2288 = vunpack.c.l.b16 %v1996
        %v2289 = vunpack.c.l.b16 %v1997
        %v2290 = vunpack.c.l.b16 %v1998
        %v2291 = vunpack.c.l.b16 %v1999
        %v2292 = vunpack.c.l.b16 %v2000
        %v2293 = vunpack.c.l.b16 %v2001
        %v2294 = vunpack.c.l.b16 %v2002
        %v2295 = vunpack.c.l.b16 %v2003
        %v2296 = vunpack.c.l.b16 %v2004
        %v2297 = vunpack.c.l.b16 %v2005
        %v2298 = vunpack.c.l.b16 %v2006
        %v2299 = vunpack.c.l.b16 %v2007
        %v2300 = vunpack.c.l.b16 %v2008
        %v2301 = vunpack.c.l.b16 %v2009
        %v2302 = vunpack.c.l.b16 %v2010
        %v2303 = vunpack.c.l.b16 %v2011
        %v2304 = vunpack.c.l.b16 %v2012
        %v2305 = vunpack.c.l.b16 %v2013
        %v2306 = vunpack.c.l.b16 %v2014
        %v2307 = vunpack.c.l.b16 %v2015
        %v2308 = vunpack.c.l.b16 %v2016
        %v2309 = vunpack.c.l.b16 %v2017
        %v2310 = vunpack.c.l.b16 %v2018
        %v2311 = vunpack.c.l.b16 %v2019
        %v2312 = vunpack.c.l.b16 %v2020
        %v2313 = vunpack.c.l.b16 %v2021
        %v2314 = vunpack.c.l.b16 %v2022
        %v2315 = vunpack.c.l.b16 %v2023
        %v2316 = vunpack.c.l.b16 %v2024
        %v2317 = vunpack.c.l.b16 %v2025
        %v2318 = vunpack.c.l.b16 %v2026
        %v2319 = vunpack.c.l.b16 %v2027
        %v2320 = vunpack.c.l.b16 %v2028
        %v2321 = vunpack.c.l.b16 %v2029
        %v2322 = vunpack.c.l.b16 %v2030
        %v2323 = vunpack.c.l.b16 %v2031
        %v2324 = vunpack.c.l.b16 %v2032
        %v2325 = vunpack.c.l.b16 %v2033
        %v2326 = vunpack.c.l.b16 %v2034
        %v2327 = vunpack.c.l.b16 %v2035
        %v2328 = vunpack.c.l.b16 %v2036
        %v2329 = vunpack.c.l.b16 %v2037
        %v2330 = vunpack.c.l.b16 %v2038
        %v2331 = vunpack.c.l.b16 %v2039
        %v2332 = vunpack.c.l.b16 %v2040
        %v2333 = vunpack.c.l.b16 %v2041
        %v2334 = vunpack.c.l.b16 %v2042
        %v2335 = vunpack.c.l.b16 %v2043
        %v2336 = vunpack.c.l.b16 %v2044
        %v2337 = vunpack.c.l.b16 %v2045
        %v2338 = vunpack.c.l.b16 %v2046
        %v2339 = vunpack.c.l.b16 %v2047
        %v2340 = vunpack.c.l.b16 %v2048
        %v2341 = vunpack.c.l.b16 %v2049
        %v2342 = vunpack.c.l.b16 %v2050
        %v2343 = vunpack.c.l.b16 %v2051
        %v2344 = vunpack.c.l.b16 %v2052
        %v2345 = vunpack.c.l.b16 %v2053
        %v2346 = vunpack.c.l.b16 %v2054
        %v2347 = vunpack.c.l.b16 %v2055
        %v2348 = vunpack.c.l.b16 %v2056
        %v2349 = vunpack.c.l.b16 %v2057
        %v2350 = vunpack.c.l.b16 %v2058
        %v2351 = vunpack.c.l.b16 %v2059
        %v2352 = vunpack.c.l.b16 %v2060
        %v2353 = vunpack.c.l.b16 %v2061
        %v2354 = vunpack.c.l.b16 %v2062
        %v2355 = vunpack.c.l.b16 %v2063
        %v2356 = vunpack.c.l.b16 %v2064
        %v2357 = vunpack.c.l.b16 %v2065
        %v2358 = vunpack.c.l.b16 %v2066
        %v2359 = vunpack.c.l.b16 %v2067
        %v2360 = vunpack.c.l.b16 %v2068
        %v2361 = vunpack.c.l.b16 %v2069
        %v2362 = vunpack.c.l.b16 %v2070
        %v2363 = vunpack.c.l.b16 %v2071
        %v2364 = vunpack.c.l.b16 %v2072
        %v2365 = vunpack.c.l.b16 %v2073
        %v2366 = vunpack.c.l.b16 %v2074
        %v2367 = vunpack.c.l.b16 %v2075
        %v2368 = vunpack.c.l.b16 %v2076
        %v2369 = vunpack.c.l.b16 %v2077
        %v2370 = vunpack.c.l.b16 %v2078
        %v2371 = vunpack.c.l.b16 %v2079
        %v2372 = vunpack.c.l.b16 %v2080
        %v2373 = vunpack.c.l.b16 %v2081
        %v2374 = vunpack.c.l.b16 %v2082
        %v2375 = vunpack.c.l.b16 %v2083
        %v2376 = vunpack.c.l.b16 %v2084
        %v2377 = vunpack.c.l.b16 %v2085
        %v2378 = vunpack.c.l.b16 %v2086
        %v2379 = vunpack.c.l.b16 %v2087
        %v2380 = vunpack.c.l.b16 %v2088
        %v2381 = vunpack.c.l.b16 %v2089
        %v2382 = vunpack.c.l.b16 %v2090
        %v2383 = vunpack.c.l.b16 %v2091
        %v2384 = vunpack.c.l.b16 %v2092
        %v2385 = vunpack.c.l.b16 %v2093
        %v2386 = vunpack.c.l.b16 %v2094
        %v2387 = vunpack.c.l.b16 %v2095
        %v2388 = vunpack.c.l.b16 %v2096
        %v2389 = vunpack.c.l.b16 %v2097
        %v2390 = vunpack.c.l.b16 %v2098
        %v2391 = vunpack.c.l.b16 %v2099
        %v2392 = vunpack.c.l.b16 %v2100
        %v2393 = vunpack.c.l.b16 %v2101
        %v2394 = vunpack.c.l.b16 %v2102
        %v2395 = vunpack.c.l.b16 %v2103
        %v2396 = vunpack.c.l.b16 %v2104
        %v2397 = vunpack.c.l.b16 %v2105
        %v2398 = vpack.c.b16 %v2255, %v2254
        %v2399 = vpack.c.b16 %v2257, %v2256
        %v2400 = vpack.c.b16 %v2259, %v2258
        %v2401 = vpack.c.b16 %v2261, %v2260
        %v2402 = vpack.c.b16 %v2263, %v2262
        %v2403 = vpack.c.b16 %v2265, %v2264
        %v2404 = vpack.c.b16 %v2267, %v2266
        %v2405 = vpack.c.b16 %v2269, %v2268
        %v2406 = vpack.c.b16 %v2271, %v2270
        %v2407 = vpack.c.b16 %v2273, %v2272
        %v2408 = vpack.c.b16 %v2275, %v2274
        %v2409 = vpack.c.b16 %v2277, %v2276
        %v2410 = vpack.c.b16 %v2279, %v2278
        %v2411 = vpack.c.b16 %v2281, %v2280
        %v2412 = vpack.c.b16 %v2283, %v2282
        %v2413 = vpack.c.b16 %v2285, %v2284
        %v2414 = vpack.c.b16 %v2287, %v2286
        %v2415 = vpack.c.b16 %v2289, %v2288
        %v2416 = vpack.c.b16 %v2291, %v2290
        %v2417 = vpack.c.b16 %v2293, %v2292
        %v2418 = vpack.c.b16 %v2295, %v2294
        %v2419 = vpack.c.b16 %v2297, %v2296
        %v2420 = vpack.c.b16 %v2299, %v2298
        %v2421 = vpack.c.b16 %v2301, %v2300
        %v2422 = vpack.c.b16 %v2303, %v2302
        %v2423 = vpack.c.b16 %v2305, %v2304
        %v2424 = vpack.c.b16 %v2307, %v2306
        %v2425 = vpack.c.b16 %v2309, %v2308
        %v2426 = vpack.c.b16 %v2311, %v2310
        %v2427 = vpack.c.b16 %v2313, %v2312
        %v2428 = vpack.c.b16 %v2315, %v2314
        %v2429 = vpack.c.b16 %v2317, %v2316
        %v2430 = vpack.c.b16 %v2319, %v2318
        %v2431 = vpack.c.b16 %v2321, %v2320
        %v2432 = vpack.c.b16 %v2323, %v2322
        %v2433 = vpack.c.b16 %v2325, %v2324
        %v2434 = vpack.c.b16 %v2327, %v2326
        %v2435 = vpack.c.b16 %v2329, %v2328
        %v2436 = vpack.c.b16 %v2331, %v2330
        %v2437 = vpack.c.b16 %v2333, %v2332
        %v2438 = vpack.c.b16 %v2335, %v2334
        %v2439 = vpack.c.b16 %v2337, %v2336
        %v2440 = vpack.c.b16 %v2339, %v2338
        %v2441 = vpack.c.b16 %v2341, %v2340
        %v2442 = vpack.c.b16 %v2343, %v2342
        %v2443 = vpack.c.b16 %v2345, %v2344
        %v2444 = vpack.c.b16 %v2347, %v2346
        %v2445 = vpack.c.b16 %v2349, %v2348
        %v2446 = vpack.c.b16 %v2351, %v2350
        %v2447 = vpack.c.b16 %v2353, %v2352
        %v2448 = vpack.c.b16 %v2355, %v2354
        %v2449 = vpack.c.b16 %v2357, %v2356
        %v2450 = vpack.c.b16 %v2359, %v2358
        %v2451 = vpack.c.b16 %v2361, %v2360
        %v2452 = vpack.c.b16 %v2363, %v2362
        %v2453 = vpack.c.b16 %v2365, %v2364
        %v2454 = vpack.c.b16 %v2367, %v2366
        %v2455 = vpack.c.b16 %v2369, %v2368
        %v2456 = vpack.c.b16 %v2371, %v2370
        %v2457 = vpack.c.b16 %v2373, %v2372
        %v2458 = vpack.c.b16 %v2375, %v2374
        %v2459 = vpack.c.b16 %v2377, %v2376
        %v2460 = vpack.c.b16 %v2379, %v2378
        %v2461 = vpack.c.b16 %v2381, %v2380
        %v2462 = vpack.c.b16 %v2383, %v2382
        %v2463 = vpack.c.b16 %v2385, %v2384
        %v2464 = vpack.c.b16 %v2387, %v2386
        %v2465 = vpack.c.b16 %v2389, %v2388
        %v2466 = vpack.c.b16 %v2391, %v2390
        %v2467 = vpack.c.b16 %v2393, %v2392
        %v2468 = vpack.c.b16 %v2395, %v2394
        %v2469 = vpack.c.b16 %v2397, %v2396
        %2542 = vmatpush.bf16.msra.mxu0 %v2405
        %2543 = vmatpush.bf16.msra.mxu0 %v2404
        %2544 = vmatpush.bf16.msra.mxu0 %v2403
        %2545 = vmatpush.bf16.msra.mxu0 %v2402
        %2546 = vmatpush.bf16.msra.mxu0 %v2401
        %2547 = vmatpush.bf16.msra.mxu0 %v2400
        %2548 = vmatpush.bf16.msra.mxu0 %v2399
        %2549 = vmatpush.bf16.msra.mxu0 %v2398
        %2550 = vmatmul.bf16.gmra.mxu0 %v1886
        %v2551 = vpop.f32.mrf.mxu0
        %v2552 = vadd.f32 %v2108, %v2551
        %v2553 = vpop.f32.mrf.mxu0
        %v2554 = vadd.f32 %v2108, %v2553
        %2555 = vmatmul.bf16.gmra.mxu0 %v1887
        %v2556 = vpop.f32.mrf.mxu0
        %v2557 = vadd.f32 %v2108, %v2556
        %v2558 = vpop.f32.mrf.mxu0
        %v2559 = vadd.f32 %v2108, %v2558
        %2560 = vmatmul.bf16.gmra.mxu0 %v1888
        %v2561 = vpop.f32.mrf.mxu0
        %v2562 = vadd.f32 %v2108, %v2561
        %v2563 = vpop.f32.mrf.mxu0
        %v2564 = vadd.f32 %v2108, %v2563
        %2565 = vmatmul.bf16.gmra.mxu0 %v1889
        %v2566 = vpop.f32.mrf.mxu0
        %v2567 = vadd.f32 %v2108, %v2566
        %v2568 = vpop.f32.mrf.mxu0
        %v2569 = vadd.f32 %v2108, %v2568
        %2570 = vdwg.mxu0
        %2571 = vmatpush.bf16.msra.mxu0 %v2413
        %2572 = vmatpush.bf16.msra.mxu0 %v2412
        %2573 = vmatpush.bf16.msra.mxu0 %v2411
        %2574 = vmatpush.bf16.msra.mxu0 %v2410
        %2575 = vmatpush.bf16.msra.mxu0 %v2409
        %2576 = vmatpush.bf16.msra.mxu0 %v2408
        %2577 = vmatpush.bf16.msra.mxu0 %v2407
        %2578 = vmatpush.bf16.msra.mxu0 %v2406
        %2579 = vmatmul.bf16.gmra.mxu0 %v1902
        %v2580 = vpop.f32.mrf.mxu0
        %v2581 = vadd.f32 %v2552, %v2580
        %v2582 = vpop.f32.mrf.mxu0
        %v2583 = vadd.f32 %v2554, %v2582
        %2584 = vmatmul.bf16.gmra.mxu0 %v1903
        %v2585 = vpop.f32.mrf.mxu0
        %v2586 = vadd.f32 %v2557, %v2585
        %v2587 = vpop.f32.mrf.mxu0
        %v2588 = vadd.f32 %v2559, %v2587
        %2589 = vmatmul.bf16.gmra.mxu0 %v1904
        %v2590 = vpop.f32.mrf.mxu0
        %v2591 = vadd.f32 %v2562, %v2590
        %v2592 = vpop.f32.mrf.mxu0
        %v2593 = vadd.f32 %v2564, %v2592
        %2594 = vmatmul.bf16.gmra.mxu0 %v1905
        %v2595 = vpop.f32.mrf.mxu0
        %v2596 = vadd.f32 %v2567, %v2595
        %v2597 = vpop.f32.mrf.mxu0
        %v2598 = vadd.f32 %v2569, %v2597
        %2599 = vdwg.mxu0
        %2600 = vmatpush.bf16.msra.mxu0 %v2421
        %2601 = vmatpush.bf16.msra.mxu0 %v2420
        %2602 = vmatpush.bf16.msra.mxu0 %v2419
        %2603 = vmatpush.bf16.msra.mxu0 %v2418
        %2604 = vmatpush.bf16.msra.mxu0 %v2417
        %2605 = vmatpush.bf16.msra.mxu0 %v2416
        %2606 = vmatpush.bf16.msra.mxu0 %v2415
        %2607 = vmatpush.bf16.msra.mxu0 %v2414
        %2608 = vmatmul.bf16.gmra.mxu0 %v1918
        %v2609 = vpop.f32.mrf.mxu0
        %v2610 = vadd.f32 %v2581, %v2609
        %v2611 = vpop.f32.mrf.mxu0
        %v2612 = vadd.f32 %v2583, %v2611
        %2613 = vmatmul.bf16.gmra.mxu0 %v1919
        %v2614 = vpop.f32.mrf.mxu0
        %v2615 = vadd.f32 %v2586, %v2614
        %v2616 = vpop.f32.mrf.mxu0
        %v2617 = vadd.f32 %v2588, %v2616
        %2618 = vmatmul.bf16.gmra.mxu0 %v1920
        %v2619 = vpop.f32.mrf.mxu0
        %v2620 = vadd.f32 %v2591, %v2619
        %v2621 = vpop.f32.mrf.mxu0
        %v2622 = vadd.f32 %v2593, %v2621
        %2623 = vmatmul.bf16.gmra.mxu0 %v1921
        %v2624 = vpop.f32.mrf.mxu0
        %v2625 = vadd.f32 %v2596, %v2624
        %v2626 = vpop.f32.mrf.mxu0
        %v2627 = vadd.f32 %v2598, %v2626
        %2628 = vdwg.mxu0
        %2629 = vmatpush.bf16.msra.mxu0 %v2429
        %2630 = vmatpush.bf16.msra.mxu0 %v2428
        %2631 = vmatpush.bf16.msra.mxu0 %v2427
        %2632 = vmatpush.bf16.msra.mxu0 %v2426
        %2633 = vmatpush.bf16.msra.mxu0 %v2425
        %2634 = vmatpush.bf16.msra.mxu0 %v2424
        %2635 = vmatpush.bf16.msra.mxu0 %v2423
        %2636 = vmatpush.bf16.msra.mxu0 %v2422
        %2637 = vmatmul.bf16.gmra.mxu0 %v1927
        %v2638 = vpop.f32.mrf.mxu0
        %v2639 = vadd.f32 %v2610, %v2638
        %v2640 = vpop.f32.mrf.mxu0
        %v2641 = vadd.f32 %v2612, %v2640
        %2642 = vmatmul.bf16.gmra.mxu0 %v1928
        %v2643 = vpop.f32.mrf.mxu0
        %v2644 = vadd.f32 %v2615, %v2643
        %v2645 = vpop.f32.mrf.mxu0
        %v2646 = vadd.f32 %v2617, %v2645
        %2647 = vmatmul.bf16.gmra.mxu0 %v1929
        %v2648 = vpop.f32.mrf.mxu0
        %v2649 = vadd.f32 %v2620, %v2648
        %v2650 = vpop.f32.mrf.mxu0
        %v2651 = vadd.f32 %v2622, %v2650
        %2652 = vmatmul.bf16.gmra.mxu0 %v1930
        %v2653 = vpop.f32.mrf.mxu0
        %v2654 = vadd.f32 %v2625, %v2653
        %v2655 = vpop.f32.mrf.mxu0
        %v2656 = vadd.f32 %v2627, %v2655
        %2657 = vdwg.mxu0
        %2658 = vmatpush.bf16.msra.mxu0 %v2437
        %2659 = vmatpush.bf16.msra.mxu0 %v2436
        %2660 = vmatpush.bf16.msra.mxu0 %v2435
        %2661 = vmatpush.bf16.msra.mxu0 %v2434
        %2662 = vmatpush.bf16.msra.mxu0 %v2433
        %2663 = vmatpush.bf16.msra.mxu0 %v2432
        %2664 = vmatpush.bf16.msra.mxu0 %v2431
        %2665 = vmatpush.bf16.msra.mxu0 %v2430
        %2666 = vmatmul.bf16.gmra.mxu0 %v1936
        %v2667 = vpop.f32.mrf.mxu0
        %v2668 = vadd.f32 %v2639, %v2667
        %v2669 = vpop.f32.mrf.mxu0
        %v2670 = vadd.f32 %v2641, %v2669
        %2671 = vmatmul.bf16.gmra.mxu0 %v1937
        %v2672 = vpop.f32.mrf.mxu0
        %v2673 = vadd.f32 %v2644, %v2672
        %v2674 = vpop.f32.mrf.mxu0
        %v2675 = vadd.f32 %v2646, %v2674
        %2676 = vmatmul.bf16.gmra.mxu0 %v1938
        %v2677 = vpop.f32.mrf.mxu0
        %v2678 = vadd.f32 %v2649, %v2677
        %v2679 = vpop.f32.mrf.mxu0
        %v2680 = vadd.f32 %v2651, %v2679
        %2681 = vmatmul.bf16.gmra.mxu0 %v1939
        %v2682 = vpop.f32.mrf.mxu0
        %v2683 = vadd.f32 %v2654, %v2682
        %v2684 = vpop.f32.mrf.mxu0
        %v2685 = vadd.f32 %v2656, %v2684
        %2686 = vdwg.mxu0
        %2687 = vmatpush.bf16.msra.mxu0 %v2445
        %2688 = vmatpush.bf16.msra.mxu0 %v2444
        %2689 = vmatpush.bf16.msra.mxu0 %v2443
        %2690 = vmatpush.bf16.msra.mxu0 %v2442
        %2691 = vmatpush.bf16.msra.mxu0 %v2441
        %2692 = vmatpush.bf16.msra.mxu0 %v2440
        %2693 = vmatpush.bf16.msra.mxu0 %v2439
        %2694 = vmatpush.bf16.msra.mxu0 %v2438
        %2695 = vmatmul.bf16.gmra.mxu0 %v1945
        %v2696 = vpop.f32.mrf.mxu0
        %v2697 = vadd.f32 %v2668, %v2696
        %v2698 = vpop.f32.mrf.mxu0
        %v2699 = vadd.f32 %v2670, %v2698
        %2700 = vmatmul.bf16.gmra.mxu0 %v1946
        %v2701 = vpop.f32.mrf.mxu0
        %v2702 = vadd.f32 %v2673, %v2701
        %v2703 = vpop.f32.mrf.mxu0
        %v2704 = vadd.f32 %v2675, %v2703
        %2705 = vmatmul.bf16.gmra.mxu0 %v1947
        %v2706 = vpop.f32.mrf.mxu0
        %v2707 = vadd.f32 %v2678, %v2706
        %v2708 = vpop.f32.mrf.mxu0
        %v2709 = vadd.f32 %v2680, %v2708
        %2710 = vmatmul.bf16.gmra.mxu0 %v1948
        %v2711 = vpop.f32.mrf.mxu0
        %v2712 = vadd.f32 %v2683, %v2711
        %v2713 = vpop.f32.mrf.mxu0
        %v2714 = vadd.f32 %v2685, %v2713
        %2715 = vdwg.mxu0
        %2716 = vmatpush.bf16.msra.mxu0 %v2453
        %2717 = vmatpush.bf16.msra.mxu0 %v2452
        %2718 = vmatpush.bf16.msra.mxu0 %v2451
        %2719 = vmatpush.bf16.msra.mxu0 %v2450
        %2720 = vmatpush.bf16.msra.mxu0 %v2449
        %2721 = vmatpush.bf16.msra.mxu0 %v2448
        %2722 = vmatpush.bf16.msra.mxu0 %v2447
        %2723 = vmatpush.bf16.msra.mxu0 %v2446
        %2724 = vmatmul.bf16.gmra.mxu0 %v1887
        %v2725 = vpop.f32.mrf.mxu0
        %v2726 = vadd.f32 %v2697, %v2725
        %v2727 = vpop.f32.mrf.mxu0
        %v2728 = vadd.f32 %v2699, %v2727
        %2729 = vmatmul.bf16.gmra.mxu0 %v1888
        %v2730 = vpop.f32.mrf.mxu0
        %v2731 = vadd.f32 %v2702, %v2730
        %v2732 = vpop.f32.mrf.mxu0
        %v2733 = vadd.f32 %v2704, %v2732
        %2734 = vmatmul.bf16.gmra.mxu0 %v1889
        %v2735 = vpop.f32.mrf.mxu0
        %v2736 = vadd.f32 %v2707, %v2735
        %v2737 = vpop.f32.mrf.mxu0
        %v2738 = vadd.f32 %v2709, %v2737
        %2739 = vmatmul.bf16.gmra.mxu0 %v1954
        %v2740 = vpop.f32.mrf.mxu0
        %v2741 = vadd.f32 %v2712, %v2740
        %v2742 = vpop.f32.mrf.mxu0
        %v2743 = vadd.f32 %v2714, %v2742
        %2744 = vdwg.mxu0
        %2745 = vmatpush.bf16.msra.mxu0 %v2461
        %2746 = vmatpush.bf16.msra.mxu0 %v2460
        %2747 = vmatpush.bf16.msra.mxu0 %v2459
        %2748 = vmatpush.bf16.msra.mxu0 %v2458
        %2749 = vmatpush.bf16.msra.mxu0 %v2457
        %2750 = vmatpush.bf16.msra.mxu0 %v2456
        %2751 = vmatpush.bf16.msra.mxu0 %v2455
        %2752 = vmatpush.bf16.msra.mxu0 %v2454
        %2753 = vmatmul.bf16.gmra.mxu0 %v1903
        %v2754 = vpop.f32.mrf.mxu0
        %v2755 = vadd.f32 %v2726, %v2754
        %v2756 = vpop.f32.mrf.mxu0
        %v2757 = vadd.f32 %v2728, %v2756
        %2758 = vmatmul.bf16.gmra.mxu0 %v1904
        %v2759 = vpop.f32.mrf.mxu0
        %v2760 = vadd.f32 %v2731, %v2759
        %v2761 = vpop.f32.mrf.mxu0
        %v2762 = vadd.f32 %v2733, %v2761
        %2763 = vmatmul.bf16.gmra.mxu0 %v1905
        %v2764 = vpop.f32.mrf.mxu0
        %v2765 = vadd.f32 %v2736, %v2764
        %v2766 = vpop.f32.mrf.mxu0
        %v2767 = vadd.f32 %v2738, %v2766
        %2768 = vmatmul.bf16.gmra.mxu0 %v1957
        %v2769 = vpop.f32.mrf.mxu0
        %v2770 = vadd.f32 %v2741, %v2769
        %v2771 = vpop.f32.mrf.mxu0
        %v2772 = vadd.f32 %v2743, %v2771
        %2773 = vdwg.mxu0
        %2774 = vmatpush.bf16.msra.mxu0 %v2469
        %2775 = vmatpush.bf16.msra.mxu0 %v2468
        %2776 = vmatpush.bf16.msra.mxu0 %v2467
        %2777 = vmatpush.bf16.msra.mxu0 %v2466
        %2778 = vmatpush.bf16.msra.mxu0 %v2465
        %2779 = vmatpush.bf16.msra.mxu0 %v2464
        %2780 = vmatpush.bf16.msra.mxu0 %v2463
        %2781 = vmatpush.bf16.msra.mxu0 %v2462
        %2782 = vmatmul.bf16.gmra.mxu0 %v1919
        %v2783 = vpop.f32.mrf.mxu0
        %v2784 = vadd.f32 %v2755, %v2783
        %v2785 = vpop.f32.mrf.mxu0
        %v2786 = vadd.f32 %v2757, %v2785
        %2787 = vmatmul.bf16.gmra.mxu0 %v1920
        %v2788 = vpop.f32.mrf.mxu0
        %v2789 = vadd.f32 %v2760, %v2788
        %v2790 = vpop.f32.mrf.mxu0
        %v2791 = vadd.f32 %v2762, %v2790
        %2792 = vmatmul.bf16.gmra.mxu0 %v1921
        %v2793 = vpop.f32.mrf.mxu0
        %v2794 = vadd.f32 %v2765, %v2793
        %v2795 = vpop.f32.mrf.mxu0
        %v2796 = vadd.f32 %v2767, %v2795
        %2797 = vmatmul.bf16.gmra.mxu0 %v1960
        %v2798 = vpop.f32.mrf.mxu0
        %v2799 = vadd.f32 %v2770, %v2798
        %v2800 = vpop.f32.mrf.mxu0
        %v2801 = vadd.f32 %v2772, %v2800
        %2802 = vdwg.mxu0
        %vm2819 = vcmask 1046528
        %v2820 = vrot.slane %v280, 1
        %v2821 = vrot.slane %v281, 1
        %v2822 = vsel %vm2819, %v2820, %v2821
        %v2823 = vrot.slane %v282, 1
        %v2824 = vrot.slane %v283, 1
        %v2825 = vsel %vm2819, %v2823, %v2824
        %v2826 = vrot.slane %v284, 1
        %v2827 = vrot.slane %v285, 1
        %v2828 = vsel %vm2819, %v2826, %v2827
        %v2829 = vrot.slane %v286, 1
        %v2830 = vrot.slane %v287, 1
        %v2831 = vsel %vm2819, %v2829, %v2830
        %v2832 = vrot.slane %v288, 1
        %v2833 = vrot.slane %v289, 1
        %v2834 = vsel %vm2819, %v2832, %v2833
        %v2835 = vrot.slane %v290, 1
        %v2836 = vrot.slane %v291, 1
        %v2837 = vsel %vm2819, %v2835, %v2836
        %v2838 = vrot.slane %v292, 1
        %v2839 = vrot.slane %v293, 1
        %v2840 = vsel %vm2819, %v2838, %v2839
        %v2841 = vrot.slane %v294, 1
        %v2842 = vrot.slane %v295, 1
        %v2843 = vsel %vm2819, %v2841, %v2842
        %v2852 = vadd.f32 %v2784, %v2822
        %v2853 = vadd.f32 %v2786, %v2825
        %v2854 = vadd.f32 %v2789, %v2828
        %v2855 = vadd.f32 %v2791, %v2831
        %v2856 = vadd.f32 %v2794, %v2834
        %v2857 = vadd.f32 %v2796, %v2837
        %v2858 = vadd.f32 %v2799, %v2840
        %v2859 = vadd.f32 %v2801, %v2843
        %2860 = vst [vmem:[%s251] sm:$0xff] %v2852
        %2861 = vst [vmem:[%s251 + $0x8] sm:$0xff] %v2853
        %2862 = vst [vmem:[%s251 + $0x10] sm:$0xff] %v2854
        %2863 = vst [vmem:[%s251 + $0x18] sm:$0xff] %v2855
        %2864 = vst [vmem:[%s251 + $0x20] sm:$0xff] %v2856
        %2865 = vst [vmem:[%s251 + $0x28] sm:$0xff] %v2857
        %2866 = vst [vmem:[%s251 + $0x30] sm:$0xff] %v2858
        %2867 = vst [vmem:[%s251 + $0x38] sm:$0xff] %v2859
        %s2868 = sand.u32 %s139, 1
        %s2869 = scalar_lea.sflag [#allocation5], %s2868
        %s2870 = sand.u32 %s139, 1
        %s2871 = smul.addr %s2870, 64
        %s2872 = scalar_lea.vmem [#allocation8], %s2871
        // Predicated region
        $region49: #{tpu_custom_call.1} parent=39 // pred_check
          %p2873 = pneg %p149
        $region50: #{tpu_custom_call.1} parent=39 // pred_check_branch
          %2875 = sbr.rel (%p2873) target = $region52
        $region51: #{tpu_custom_call.1} parent=39 // pred_region
          %2877 = vsyncadd %s2869, 0
          %s2878 = smul.addr %s21, 8
          %s2879 = smul.addr %s2878, 8
          %s2880 = scalar_lea.hbm %s5, %s2879
          %s2881 = sshll.u32 %s2872, 4
          %s2882 = int_to_ptr.vmem [resolvable:$true] %s2881
          %s2883 = sshll.u32 %s2880, 4
          %s2884 = int_to_ptr.hbm [resolvable:$true] %s2883
          %2889 = dma.vmem_to_hbm [thread:$0]  %s2882, 1024, %s2884, %s2869, 128, 128, 8
        $region52: #{tpu_custom_call.1} parent=39 // pred_fallthru
          _
      $region40: #{tpu_custom_call.1} parent=5 // pred_fallthru
        _
      %p2890 = scmp.le.s32.totalorder 2, %s16
      // Predicated region
      $region53: #{tpu_custom_call.1} parent=5 // pred_check
        %p2891 = pneg %p2890
      $region54: #{tpu_custom_call.1} parent=5 // pred_check_branch
        %2893 = sbr.rel (%p2891) target = $region56
      $region55: #{tpu_custom_call.1} parent=5 // pred_region
        %s2894 = ssub.s32 %s16, 2
        // Predicated region
        $region57: #{tpu_custom_call.1} parent=55 // pred_check
          %p2895 = pneg %p155
        $region58: #{tpu_custom_call.1} parent=55 // pred_check_branch
          %2897 = sbr.rel (%p2895) target = $region60
        $region59: #{tpu_custom_call.1} parent=55 // pred_region
          %s2898 = sand.u32 %s140, 1
          %s2899 = scalar_lea.sflag [#allocation5], %s2898
          %s2900 = sand.u32 %s140, 1
          %s2901 = smul.addr %s2900, 64
          %s2902 = scalar_lea.vmem [#allocation8], %s2901
          %2904 = dma.done %s2899, 1024
        $region60: #{tpu_custom_call.1} parent=55 // pred_fallthru
          _
      $region56: #{tpu_custom_call.1} parent=5 // pred_fallthru
        _
    $region6: #{tpu_custom_call.1} parent=1 // loop_footer
      %s20 = sadd.s32 1, %s16
    $region7: #{tpu_custom_call.1} parent=1 // loop_footer_branch
      %15 = sbr.rel target = $region3
    $region8: #{tpu_custom_call.1} parent=1 // loop_exit
      _
    %2905 = vsyncpa [#allocation4], 1
    %s2906 = scalar_lea.sflag [#allocation4], 1
    %2907 = vsyncpa %s2906, 1
    %2908 = vsyncpa [#allocation7], 1
    %2909 = vsyncpa [#allocation5], 1
    %s2910 = scalar_lea.sflag [#allocation5], 1
    %2911 = vsyncpa %s2910, 1

</llo_original>
